<compile_context>
chip_gen: v7x
topology: tpu7x:2x2x1
jax: 0.10.0
libtpu: 0.0.40
codegen_flags: <defaults>
</compile_context>

<pallas_src>
import math

import numpy as np
import jax
import jax.numpy as jnp
from jax.experimental import pallas as pl
from jax.experimental.pallas import tpu as pltpu

# ---------------- small synthetic config (Deci decoder attention block) ----------------
NUM_HEADS = 4
NUM_KV_HEADS = 2
HIDDEN = 32
HEAD_DIM = HIDDEN // NUM_HEADS          # 8
N_REP = NUM_HEADS // NUM_KV_HEADS       # 2 (GQA group size)
MAX_POS = 32
BATCH = 2
SEQ = 8
PAST_LEN = 4
DTYPE = jnp.float32

# MXU-facing operand dtype.  jnp.float32 keeps f32-faithful math; set to
# jnp.bfloat16 on v6e/v7x for ~2x MXU throughput and half the operand bytes
# (accumulation stays f32 via preferred_element_type).
MXU_DTYPE = jnp.float32


def _mdot(a, b):
    """MXU matmul with f32 accumulation."""
    return jnp.dot(a.astype(MXU_DTYPE), b.astype(MXU_DTYPE),
                   preferred_element_type=jnp.float32)


# ======================= fused GQA attention kernel =======================

def _gqa_fused_kernel(x_ref, wq_ref, wk_ref, wv_ref, wo_ref,
                      cos_ref, sin_ref, past_ref, mask_ref,
                      out_ref, present_ref):
    S = x_ref.shape[1]
    D = HEAD_DIM
    Dh = D // 2
    scale = 1.0 / math.sqrt(D)                 # folded into q (cheaper than scores/norm)

    x = x_ref[0].astype(jnp.float32)           # (S, HIDDEN)

    # ---- fused q/k/v projections, lane-packed (S, heads*head_dim) ----
    q = _mdot(x, wq_ref[...]) * scale          # (S, H*D)
    k = _mdot(x, wk_ref[...])                  # (S, KVH*D)
    v = _mdot(x, wv_ref[...])                  # (S, KVH*D)

    cos = cos_ref[...].astype(jnp.float32)     # (S, D/2) half-dim RoPE tables
    sin = sin_ref[...].astype(jnp.float32)
    mask = mask_ref[0].astype(jnp.float32)     # (S, L) additive causal mask
    past = past_ref[0].astype(jnp.float32)     # (2, KVH, P, D)
    wo = wo_ref[...]

    # Broadcast tables over the n_rep query heads stacked per KV group.
    cos_q = jnp.tile(cos, (N_REP, 1))          # (n_rep*S, D/2)
    sin_q = jnp.tile(sin, (N_REP, 1))
    mask_q = jnp.tile(mask, (N_REP, 1))        # (n_rep*S, L)

    out = jnp.zeros((S, HIDDEN), jnp.float32)

    for g in range(NUM_KV_HEADS):              # static unroll over KV groups
        # ---- new K/V rows for this KV head (RoPE on K, half-dim form) ----
        kg = k[:, g * D:(g + 1) * D]           # (S, D)
        k1, k2 = kg[:, :Dh], kg[:, Dh:]
        kg = jnp.concatenate([k1 * cos - k2 * sin,
                              k2 * cos + k1 * sin], axis=-1)
        vg = v[:, g * D:(g + 1) * D]

        k_full = jnp.concatenate([past[0, g], kg], axis=0)   # (L, D)
        v_full = jnp.concatenate([past[1, g], vg], axis=0)

        # present = concat(past, new) written straight from the fused kernel
        present_ref[0, 0, g] = k_full.astype(present_ref.dtype)
        present_ref[0, 1, g] = v_full.astype(present_ref.dtype)

        # ---- stack the n_rep query heads of this group: one taller MXU pass ----
        qg = jnp.concatenate(
            [q[:, h * D:(h + 1) * D] for h in range(g * N_REP, (g + 1) * N_REP)],
            axis=0)                                           # (n_rep*S, D)
        q1, q2 = qg[:, :Dh], qg[:, Dh:]
        qg = jnp.concatenate([q1 * cos_q - q2 * sin_q,
                              q2 * cos_q + q1 * sin_q], axis=-1)

        # ---- attention for the whole KV group (no repeat_kv duplication) ----
        scores = _mdot(qg, k_full.T) + mask_q                 # (n_rep*S, L)
        smax = jnp.max(scores, axis=-1, keepdims=True)
        p = jnp.exp(scores - smax)
        denom = jnp.sum(p, axis=-1, keepdims=True)
        p = p * pl.reciprocal(denom, approx=True)             # EUP, no VPU divide
        ctx = _mdot(p, v_full)                                # (n_rep*S, D)

        # ---- output projection, accumulated per query head ----
        for r in range(N_REP):
            h = g * N_REP + r
            out = out + _mdot(ctx[r * S:(r + 1) * S, :], wo[h * D:(h + 1) * D, :])

    out_ref[0] = out.astype(out_ref.dtype)


def gqa_attention_forward(hidden_states, past_key_value, attention_mask,
                          wq, wk, wv, wo, cos_cache, sin_cache):
    """Mirrors GQAttention.forward: returns (attn_output, None, present)."""
    B, S, _ = hidden_states.shape
    P = past_key_value.shape[3]
    L = S + P
    KVH = NUM_KV_HEADS
    D = HEAD_DIM

    # Rotary tables for the new positions [P, L), in half-dim form (the cached
    # cos/sin duplicate the same frequencies across both halves).
    cos_h = cos_cache[P:L, :D // 2]
    sin_h = sin_cache[P:L, :D // 2]

    # causal_mask = slice(attention_mask, [0,0,L-S,0], [B,heads,S,L]); the mask
    # is head-invariant, so only the tiny (B, S, L) slice is shipped to the kernel.
    mask = attention_mask[:, 0, L - S:L, :L].astype(DTYPE)

    out, present = pl.pallas_call(
        _gqa_fused_kernel,
        grid=(B,),
        out_shape=(jax.ShapeDtypeStruct((B, S, HIDDEN), hidden_states.dtype),
                   jax.ShapeDtypeStruct((B, 2, KVH, L, D), hidden_states.dtype)),
        in_specs=[
            pl.BlockSpec((1, S, HIDDEN), lambda b: (b, 0, 0)),            # x
            pl.BlockSpec((HIDDEN, HIDDEN), lambda b: (0, 0)),             # wq (resident)
            pl.BlockSpec((HIDDEN, KVH * D), lambda b: (0, 0)),            # wk
            pl.BlockSpec((HIDDEN, KVH * D), lambda b: (0, 0)),            # wv
            pl.BlockSpec((HIDDEN, HIDDEN), lambda b: (0, 0)),             # wo
            pl.BlockSpec((S, D // 2), lambda b: (0, 0)),                  # cos (half-dim)
            pl.BlockSpec((S, D // 2), lambda b: (0, 0)),                  # sin
            pl.BlockSpec((1, 2, KVH, P, D), lambda b: (b, 0, 0, 0, 0)),   # past KV
            pl.BlockSpec((1, S, L), lambda b: (b, 0, 0)),                 # causal mask slice
        ],
        out_specs=(
            pl.BlockSpec((1, S, HIDDEN), lambda b: (b, 0, 0)),            # attn_output
            pl.BlockSpec((1, 2, KVH, L, D), lambda b: (b, 0, 0, 0, 0)),   # present KV
        ),
        compiler_params=pltpu.CompilerParams(
            dimension_semantics=("parallel",)),    # batch splits across v7x's 2 TCs
    )(hidden_states, wq, wk, wv, wo, cos_h, sin_h, past_key_value, mask)

    attention_weight = None
    return out, attention_weight, present


# ======================= reference + driver =======================

def rotary_cos_sin(head_dim, max_pos, base=10000.0):
    inv_freq = 1.0 / base ** (np.arange(0, head_dim, 2, dtype=np.float32) / head_dim)
    t = np.arange(max_pos, dtype=np.float32)
    freqs = np.einsum('i,j->ij', t, inv_freq)
    emb = np.concatenate((freqs, freqs), axis=-1)
    return np.cos(emb).astype(np.float32), np.sin(emb).astype(np.float32)


def gqa_reference(x, wq, wk, wv, wo, past, attention_mask, cos_cache, sin_cache):
    """Plain-JAX transcription of the TRT-LLM GQAttention forward."""
    B, S, _ = x.shape
    P = past.shape[3]
    L = P + S
    x2d = x.reshape(B * S, HIDDEN)
    q = (x2d @ wq).reshape(B, S, NUM_HEADS, HEAD_DIM).transpose(0, 2, 1, 3)
    k = (x2d @ wk).reshape(B, S, NUM_KV_HEADS, HEAD_DIM).transpose(0, 2, 1, 3)
    v = (x2d @ wv).reshape(B, S, NUM_KV_HEADS, HEAD_DIM).transpose(0, 2, 1, 3)
    cos = cos_cache[P:L][None, None]
    sin = sin_cache[P:L][None, None]

    def rope(t):
        d = t.shape[-1]
        t1, t2 = t[..., :d // 2], t[..., d // 2:]
        rot = jnp.concatenate([-t2, t1], axis=-1)
        return t * cos + rot * sin

    q, k = rope(q), rope(k)
    k_full = jnp.concatenate([past[:, 0], k], axis=2)
    v_full = jnp.concatenate([past[:, 1], v], axis=2)
    present = jnp.stack([k_full, v_full], axis=1)
    k_rep = jnp.repeat(k_full, N_REP, axis=1)
    v_rep = jnp.repeat(v_full, N_REP, axis=1)
    mask = attention_mask[:, :1, L - S:L, :L].astype(jnp.float32)
    scores = jnp.einsum('bhsd,bhld->bhsl', q, k_rep) / math.sqrt(HEAD_DIM) + mask
    probs = jax.nn.softmax(scores, axis=-1)
    ctx = jnp.einsum('bhsl,bhld->bhsd', probs, v_rep)
    ctx = ctx.transpose(0, 2, 1, 3).reshape(B * S, HIDDEN)
    out = (ctx @ wo).reshape(B, S, HIDDEN)
    return out, present


if __name__ == "__main__":
    root = jax.random.PRNGKey(0)
    key_x, key_q, key_k, key_v, key_o, key_p = jax.random.split(root, 6)

    hidden_states = 0.5 * jax.random.normal(key_x, (BATCH, SEQ, HIDDEN), DTYPE)
    wq = 0.05 * jax.random.normal(key_q, (HIDDEN, HIDDEN), DTYPE)
    wk = 0.05 * jax.random.normal(key_k, (HIDDEN, NUM_KV_HEADS * HEAD_DIM), DTYPE)
    wv = 0.05 * jax.random.normal(key_v, (HIDDEN, NUM_KV_HEADS * HEAD_DIM), DTYPE)
    wo = 0.05 * jax.random.normal(key_o, (HIDDEN, HIDDEN), DTYPE)
    past_key_value = 0.1 * jax.random.normal(
        key_p, (BATCH, 2, NUM_KV_HEADS, PAST_LEN, HEAD_DIM), DTYPE)

    # Additive causal mask over the max_position_embeddings window (module input).
    idx = np.arange(MAX_POS)
    causal = np.where(idx[None, :] <= idx[:, None], 0.0, -1e9).astype(np.float32)
    attention_mask = jnp.broadcast_to(jnp.asarray(causal),
                                      (BATCH, NUM_HEADS, MAX_POS, MAX_POS))

    cos_np, sin_np = rotary_cos_sin(HEAD_DIM, MAX_POS)
    cos_cache = jnp.asarray(cos_np)
    sin_cache = jnp.asarray(sin_np)

    attn_out, attn_w, present = gqa_attention_forward(
        hidden_states, past_key_value, attention_mask,
        wq, wk, wv, wo, cos_cache, sin_cache)
    jax.block_until_ready(attn_out)
    jax.block_until_ready(present)

    assert attn_out.shape == (BATCH, SEQ, HIDDEN)
    assert present.shape == (BATCH, 2, NUM_KV_HEADS, PAST_LEN + SEQ, HEAD_DIM)
    assert attn_w is None

    # Correctness check against the plain-JAX reference (loose tolerance covers
    # MXU pass precision and the approx reciprocal in the softmax).
    ref_out, ref_present = gqa_reference(hidden_states, wq, wk, wv, wo,
                                         past_key_value, attention_mask,
                                         cos_cache, sin_cache)
    np.testing.assert_allclose(np.asarray(attn_out), np.asarray(ref_out),
                               rtol=5e-2, atol=2e-3)
    np.testing.assert_allclose(np.asarray(present), np.asarray(ref_present),
                               rtol=5e-2, atol=2e-3)

    print("KERNEL_OK")
</pallas_src>

<mosaic_0001>
module attributes {stable_mosaic.version = 11 : i64} {
  func.func @_gqa_fused_kernel(%arg0: i32, %arg1: memref<1x8x32xf32, #tpu.memory_space<vmem>>, %arg2: memref<32x32xf32, #tpu.memory_space<vmem>>, %arg3: memref<32x16xf32, #tpu.memory_space<vmem>>, %arg4: memref<32x16xf32, #tpu.memory_space<vmem>>, %arg5: memref<32x32xf32, #tpu.memory_space<vmem>>, %arg6: memref<8x4xf32, #tpu.memory_space<vmem>>, %arg7: memref<8x4xf32, #tpu.memory_space<vmem>>, %arg8: memref<1x2x2x4x8xf32, #tpu.memory_space<vmem>>, %arg9: memref<1x8x12xf32, #tpu.memory_space<vmem>>, %arg10: memref<1x8x32xf32, #tpu.memory_space<vmem>>, %arg11: memref<1x2x2x12x8xf32, #tpu.memory_space<vmem>>) attributes {dimension_semantics = [#tpu.dimension_semantics<parallel>], iteration_bounds = array<i64: 2>, scalar_prefetch = 0 : i64, scratch_operands = 0 : i64, tpu.core_type = #tpu.core_type<tc>, window_params = [{transform_indices = @transform_0, window_bounds = array<i64: 1, 8, 32>}, {pipeline_mode = #tpu.pipeline_mode<synchronous>, transform_indices = @transform_1, window_bounds = array<i64: 32, 32>}, {pipeline_mode = #tpu.pipeline_mode<synchronous>, transform_indices = @transform_2, window_bounds = array<i64: 32, 16>}, {pipeline_mode = #tpu.pipeline_mode<synchronous>, transform_indices = @transform_3, window_bounds = array<i64: 32, 16>}, {pipeline_mode = #tpu.pipeline_mode<synchronous>, transform_indices = @transform_4, window_bounds = array<i64: 32, 32>}, {pipeline_mode = #tpu.pipeline_mode<synchronous>, transform_indices = @transform_5, window_bounds = array<i64: 8, 4>}, {pipeline_mode = #tpu.pipeline_mode<synchronous>, transform_indices = @transform_6, window_bounds = array<i64: 8, 4>}, {transform_indices = @transform_7, window_bounds = array<i64: 1, 2, 2, 4, 8>}, {transform_indices = @transform_8, window_bounds = array<i64: 1, 8, 12>}, {transform_indices = @transform_9, window_bounds = array<i64: 1, 8, 32>}, {transform_indices = @transform_10, window_bounds = array<i64: 1, 2, 2, 12, 8>}]} {
    %c0 = arith.constant 0 : index
    %c0_0 = arith.constant 0 : index
    %c0_1 = arith.constant 0 : index
    %0 = vector.load %arg1[%c0, %c0_0, %c0_1] : memref<1x8x32xf32, #tpu.memory_space<vmem>>, vector<1x8x32xf32>
    %1 = vector.shape_cast %0 : vector<1x8x32xf32> to vector<8x32xf32>
    %c0_2 = arith.constant 0 : index
    %c0_3 = arith.constant 0 : index
    %2 = vector.load %arg2[%c0_2, %c0_3] : memref<32x32xf32, #tpu.memory_space<vmem>>, vector<32x32xf32>
    %cst = arith.constant dense<0.000000e+00> : vector<8x32xf32>
    %3 = tpu.matmul %1, %2, %cst {dimension_numbers = #tpu.dot_dimension_numbers<[1], [0], [0], [1], [0, 0, 1, 1], [], []>} : vector<8x32xf32>, vector<32x32xf32>, vector<8x32xf32> -> vector<8x32xf32>
    %cst_4 = arith.constant 0.353553385 : f32
    %4 = vector.broadcast %cst_4 : f32 to vector<8x32xf32>
    %5 = arith.mulf %3, %4 : vector<8x32xf32>
    %c0_5 = arith.constant 0 : index
    %c0_6 = arith.constant 0 : index
    %6 = vector.load %arg3[%c0_5, %c0_6] : memref<32x16xf32, #tpu.memory_space<vmem>>, vector<32x16xf32>
    %cst_7 = arith.constant dense<0.000000e+00> : vector<8x16xf32>
    %7 = tpu.matmul %1, %6, %cst_7 {dimension_numbers = #tpu.dot_dimension_numbers<[1], [0], [0], [1], [0, 0, 1, 1], [], []>} : vector<8x32xf32>, vector<32x16xf32>, vector<8x16xf32> -> vector<8x16xf32>
    %c0_8 = arith.constant 0 : index
    %c0_9 = arith.constant 0 : index
    %8 = vector.load %arg4[%c0_8, %c0_9] : memref<32x16xf32, #tpu.memory_space<vmem>>, vector<32x16xf32>
    %cst_10 = arith.constant dense<0.000000e+00> : vector<8x16xf32>
    %9 = tpu.matmul %1, %8, %cst_10 {dimension_numbers = #tpu.dot_dimension_numbers<[1], [0], [0], [1], [0, 0, 1, 1], [], []>} : vector<8x32xf32>, vector<32x16xf32>, vector<8x16xf32> -> vector<8x16xf32>
    %c0_11 = arith.constant 0 : index
    %c0_12 = arith.constant 0 : index
    %10 = vector.load %arg6[%c0_11, %c0_12] : memref<8x4xf32, #tpu.memory_space<vmem>>, vector<8x4xf32>
    %c0_13 = arith.constant 0 : index
    %c0_14 = arith.constant 0 : index
    %11 = vector.load %arg7[%c0_13, %c0_14] : memref<8x4xf32, #tpu.memory_space<vmem>>, vector<8x4xf32>
    %c0_15 = arith.constant 0 : index
    %c0_16 = arith.constant 0 : index
    %c0_17 = arith.constant 0 : index
    %12 = vector.load %arg9[%c0_15, %c0_16, %c0_17] : memref<1x8x12xf32, #tpu.memory_space<vmem>>, vector<1x8x12xf32>
    %13 = vector.shape_cast %12 : vector<1x8x12xf32> to vector<8x12xf32>
    %c0_18 = arith.constant 0 : index
    %c0_19 = arith.constant 0 : index
    %c0_20 = arith.constant 0 : index
    %c0_21 = arith.constant 0 : index
    %c0_22 = arith.constant 0 : index
    %14 = vector.load %arg8[%c0_18, %c0_19, %c0_20, %c0_21, %c0_22] : memref<1x2x2x4x8xf32, #tpu.memory_space<vmem>>, vector<1x2x2x4x8xf32>
    %15 = vector.shape_cast %14 : vector<1x2x2x4x8xf32> to vector<2x2x4x8xf32>
    %c0_23 = arith.constant 0 : index
    %c0_24 = arith.constant 0 : index
    %16 = vector.load %arg5[%c0_23, %c0_24] : memref<32x32xf32, #tpu.memory_space<vmem>>, vector<32x32xf32>
    %17 = tpu.concatenate %10, %10 in 0 : vector<8x4xf32>, vector<8x4xf32> -> vector<16x4xf32>
    %18 = tpu.concatenate %11, %11 in 0 : vector<8x4xf32>, vector<8x4xf32> -> vector<16x4xf32>
    %19 = tpu.concatenate %13, %13 in 0 : vector<8x12xf32>, vector<8x12xf32> -> vector<16x12xf32>
    %cst_25 = arith.constant 0.000000e+00 : f32
    %20 = vector.broadcast %cst_25 : f32 to vector<8x32xf32>
    %21 = vector.extract_strided_slice %7 {offsets = [0, 0], sizes = [8, 8], strides = [1, 1]} : vector<8x16xf32> to vector<8x8xf32>
    %22 = vector.extract_strided_slice %21 {offsets = [0, 0], sizes = [8, 4], strides = [1, 1]} : vector<8x8xf32> to vector<8x4xf32>
    %23 = vector.extract_strided_slice %21 {offsets = [0, 4], sizes = [8, 4], strides = [1, 1]} : vector<8x8xf32> to vector<8x4xf32>
    %24 = arith.mulf %22, %10 : vector<8x4xf32>
    %25 = arith.mulf %23, %11 : vector<8x4xf32>
    %26 = arith.subf %24, %25 : vector<8x4xf32>
    %27 = arith.mulf %23, %10 : vector<8x4xf32>
    %28 = arith.mulf %22, %11 : vector<8x4xf32>
    %29 = arith.addf %27, %28 : vector<8x4xf32>
    %30 = tpu.concatenate %26, %29 in 1 : vector<8x4xf32>, vector<8x4xf32> -> vector<8x8xf32>
    %31 = vector.extract_strided_slice %9 {offsets = [0, 0], sizes = [8, 8], strides = [1, 1]} : vector<8x16xf32> to vector<8x8xf32>
    %32 = vector.extract_strided_slice %15 {offsets = [0, 0, 0, 0], sizes = [1, 1, 4, 8], strides = [1, 1, 1, 1]} : vector<2x2x4x8xf32> to vector<1x1x4x8xf32>
    %33 = vector.shape_cast %32 : vector<1x1x4x8xf32> to vector<4x8xf32>
    %34 = tpu.concatenate %33, %30 in 0 : vector<4x8xf32>, vector<8x8xf32> -> vector<12x8xf32>
    %35 = vector.extract_strided_slice %15 {offsets = [1, 0, 0, 0], sizes = [1, 1, 4, 8], strides = [1, 1, 1, 1]} : vector<2x2x4x8xf32> to vector<1x1x4x8xf32>
    %36 = vector.shape_cast %35 : vector<1x1x4x8xf32> to vector<4x8xf32>
    %37 = tpu.concatenate %36, %31 in 0 : vector<4x8xf32>, vector<8x8xf32> -> vector<12x8xf32>
    %c0_26 = arith.constant 0 : index
    %c0_27 = arith.constant 0 : index
    %c0_28 = arith.constant 0 : index
    %c0_29 = arith.constant 0 : index
    %c0_30 = arith.constant 0 : index
    %38 = vector.load %arg11[%c0_26, %c0_27, %c0_28, %c0_29, %c0_30] : memref<1x2x2x12x8xf32, #tpu.memory_space<vmem>>, vector<1x1x1x12x8xf32>
    %39 = vector.shape_cast %38 : vector<1x1x1x12x8xf32> to vector<12x8xf32>
    %40 = vector.shape_cast %34 : vector<12x8xf32> to vector<1x1x1x12x8xf32>
    tpu.vector_store %arg11[%c0_26, %c0_27, %c0_28, %c0_29, %c0_30], %40 {strides = array<i32>} : memref<1x2x2x12x8xf32, #tpu.memory_space<vmem>>, vector<1x1x1x12x8xf32>,
    %c0_31 = arith.constant 0 : index
    %c1 = arith.constant 1 : index
    %c0_32 = arith.constant 0 : index
    %c0_33 = arith.constant 0 : index
    %c0_34 = arith.constant 0 : index
    %41 = vector.load %arg11[%c0_31, %c1, %c0_32, %c0_33, %c0_34] : memref<1x2x2x12x8xf32, #tpu.memory_space<vmem>>, vector<1x1x1x12x8xf32>
    %42 = vector.shape_cast %41 : vector<1x1x1x12x8xf32> to vector<12x8xf32>
    %43 = vector.shape_cast %37 : vector<12x8xf32> to vector<1x1x1x12x8xf32>
    tpu.vector_store %arg11[%c0_31, %c1, %c0_32, %c0_33, %c0_34], %43 {strides = array<i32>} : memref<1x2x2x12x8xf32, #tpu.memory_space<vmem>>, vector<1x1x1x12x8xf32>,
    %44 = vector.extract_strided_slice %5 {offsets = [0, 0], sizes = [8, 8], strides = [1, 1]} : vector<8x32xf32> to vector<8x8xf32>
    %45 = vector.extract_strided_slice %5 {offsets = [0, 8], sizes = [8, 8], strides = [1, 1]} : vector<8x32xf32> to vector<8x8xf32>
    %46 = tpu.concatenate %44, %45 in 0 : vector<8x8xf32>, vector<8x8xf32> -> vector<16x8xf32>
    %47 = vector.extract_strided_slice %46 {offsets = [0, 0], sizes = [16, 4], strides = [1, 1]} : vector<16x8xf32> to vector<16x4xf32>
    %48 = vector.extract_strided_slice %46 {offsets = [0, 4], sizes = [16, 4], strides = [1, 1]} : vector<16x8xf32> to vector<16x4xf32>
    %49 = arith.mulf %47, %17 : vector<16x4xf32>
    %50 = arith.mulf %48, %18 : vector<16x4xf32>
    %51 = arith.subf %49, %50 : vector<16x4xf32>
    %52 = arith.mulf %48, %17 : vector<16x4xf32>
    %53 = arith.mulf %47, %18 : vector<16x4xf32>
    %54 = arith.addf %52, %53 : vector<16x4xf32>
    %55 = tpu.concatenate %51, %54 in 1 : vector<16x4xf32>, vector<16x4xf32> -> vector<16x8xf32>
    %56 = tpu.transpose %34, [1, 0] : vector<12x8xf32> -> vector<8x12xf32>
    %cst_35 = arith.constant dense<0.000000e+00> : vector<16x12xf32>
    %57 = tpu.matmul %55, %56, %cst_35 {dimension_numbers = #tpu.dot_dimension_numbers<[1], [0], [0], [1], [0, 0, 1, 1], [], []>} : vector<16x8xf32>, vector<8x12xf32>, vector<16x12xf32> -> vector<16x12xf32>
    %58 = arith.addf %57, %19 : vector<16x12xf32>
    %cst_36 = arith.constant dense<0xFF800000> : vector<16xf32>
    %59 = vector.multi_reduction <maximumf>, %58, %cst_36 [1] : vector<16x12xf32> to vector<16xf32>
    %60 = vector.shape_cast %59 : vector<16xf32> to vector<16x1xf32>
    %61 = vector.broadcast %60 : vector<16x1xf32> to vector<16x12xf32>
    %62 = arith.subf %58, %61 : vector<16x12xf32>
    %63 = math.exp %62 : vector<16x12xf32>
    %cst_37 = arith.constant dense<0.000000e+00> : vector<16xf32>
    %64 = vector.multi_reduction <add>, %63, %cst_37 [1] : vector<16x12xf32> to vector<16xf32>
    %65 = vector.shape_cast %64 : vector<16xf32> to vector<16x1xf32>
    %66 = tpu.reciprocal %65 {approx = true} : vector<16x1xf32> -> vector<16x1xf32>
    %67 = vector.broadcast %66 : vector<16x1xf32> to vector<16x12xf32>
    %68 = arith.mulf %63, %67 : vector<16x12xf32>
    %cst_38 = arith.constant dense<0.000000e+00> : vector<16x8xf32>
    %69 = tpu.matmul %68, %37, %cst_38 {dimension_numbers = #tpu.dot_dimension_numbers<[1], [0], [0], [1], [0, 0, 1, 1], [], []>} : vector<16x12xf32>, vector<12x8xf32>, vector<16x8xf32> -> vector<16x8xf32>
    %70 = vector.extract_strided_slice %69 {offsets = [0, 0], sizes = [8, 8], strides = [1, 1]} : vector<16x8xf32> to vector<8x8xf32>
    %71 = vector.extract_strided_slice %16 {offsets = [0, 0], sizes = [8, 32], strides = [1, 1]} : vector<32x32xf32> to vector<8x32xf32>
    %cst_39 = arith.constant dense<0.000000e+00> : vector<8x32xf32>
    %72 = tpu.matmul %70, %71, %cst_39 {dimension_numbers = #tpu.dot_dimension_numbers<[1], [0], [0], [1], [0, 0, 1, 1], [], []>} : vector<8x8xf32>, vector<8x32xf32>, vector<8x32xf32> -> vector<8x32xf32>
    %73 = arith.addf %20, %72 : vector<8x32xf32>
    %74 = vector.extract_strided_slice %69 {offsets = [8, 0], sizes = [8, 8], strides = [1, 1]} : vector<16x8xf32> to vector<8x8xf32>
    %75 = vector.extract_strided_slice %16 {offsets = [8, 0], sizes = [8, 32], strides = [1, 1]} : vector<32x32xf32> to vector<8x32xf32>
    %cst_40 = arith.constant dense<0.000000e+00> : vector<8x32xf32>
    %76 = tpu.matmul %74, %75, %cst_40 {dimension_numbers = #tpu.dot_dimension_numbers<[1], [0], [0], [1], [0, 0, 1, 1], [], []>} : vector<8x8xf32>, vector<8x32xf32>, vector<8x32xf32> -> vector<8x32xf32>
    %77 = arith.addf %73, %76 : vector<8x32xf32>
    %78 = vector.extract_strided_slice %7 {offsets = [0, 8], sizes = [8, 8], strides = [1, 1]} : vector<8x16xf32> to vector<8x8xf32>
    %79 = vector.extract_strided_slice %78 {offsets = [0, 0], sizes = [8, 4], strides = [1, 1]} : vector<8x8xf32> to vector<8x4xf32>
    %80 = vector.extract_strided_slice %78 {offsets = [0, 4], sizes = [8, 4], strides = [1, 1]} : vector<8x8xf32> to vector<8x4xf32>
    %81 = arith.mulf %79, %10 : vector<8x4xf32>
    %82 = arith.mulf %80, %11 : vector<8x4xf32>
    %83 = arith.subf %81, %82 : vector<8x4xf32>
    %84 = arith.mulf %80, %10 : vector<8x4xf32>
    %85 = arith.mulf %79, %11 : vector<8x4xf32>
    %86 = arith.addf %84, %85 : vector<8x4xf32>
    %87 = tpu.concatenate %83, %86 in 1 : vector<8x4xf32>, vector<8x4xf32> -> vector<8x8xf32>
    %88 = vector.extract_strided_slice %9 {offsets = [0, 8], sizes = [8, 8], strides = [1, 1]} : vector<8x16xf32> to vector<8x8xf32>
    %89 = vector.extract_strided_slice %15 {offsets = [0, 1, 0, 0], sizes = [1, 1, 4, 8], strides = [1, 1, 1, 1]} : vector<2x2x4x8xf32> to vector<1x1x4x8xf32>
    %90 = vector.shape_cast %89 : vector<1x1x4x8xf32> to vector<4x8xf32>
    %91 = tpu.concatenate %90, %87 in 0 : vector<4x8xf32>, vector<8x8xf32> -> vector<12x8xf32>
    %92 = vector.extract_strided_slice %15 {offsets = [1, 1, 0, 0], sizes = [1, 1, 4, 8], strides = [1, 1, 1, 1]} : vector<2x2x4x8xf32> to vector<1x1x4x8xf32>
    %93 = vector.shape_cast %92 : vector<1x1x4x8xf32> to vector<4x8xf32>
    %94 = tpu.concatenate %93, %88 in 0 : vector<4x8xf32>, vector<8x8xf32> -> vector<12x8xf32>
    %c0_41 = arith.constant 0 : index
    %c0_42 = arith.constant 0 : index
    %c1_43 = arith.constant 1 : index
    %c0_44 = arith.constant 0 : index
    %c0_45 = arith.constant 0 : index
    %95 = vector.load %arg11[%c0_41, %c0_42, %c1_43, %c0_44, %c0_45] : memref<1x2x2x12x8xf32, #tpu.memory_space<vmem>>, vector<1x1x1x12x8xf32>
    %96 = vector.shape_cast %95 : vector<1x1x1x12x8xf32> to vector<12x8xf32>
    %97 = vector.shape_cast %91 : vector<12x8xf32> to vector<1x1x1x12x8xf32>
    tpu.vector_store %arg11[%c0_41, %c0_42, %c1_43, %c0_44, %c0_45], %97 {strides = array<i32>} : memref<1x2x2x12x8xf32, #tpu.memory_space<vmem>>, vector<1x1x1x12x8xf32>,
    %c0_46 = arith.constant 0 : index
    %c1_47 = arith.constant 1 : index
    %c1_48 = arith.constant 1 : index
    %c0_49 = arith.constant 0 : index
    %c0_50 = arith.constant 0 : index
    %98 = vector.load %arg11[%c0_46, %c1_47, %c1_48, %c0_49, %c0_50] : memref<1x2x2x12x8xf32, #tpu.memory_space<vmem>>, vector<1x1x1x12x8xf32>
    %99 = vector.shape_cast %98 : vector<1x1x1x12x8xf32> to vector<12x8xf32>
    %100 = vector.shape_cast %94 : vector<12x8xf32> to vector<1x1x1x12x8xf32>
    tpu.vector_store %arg11[%c0_46, %c1_47, %c1_48, %c0_49, %c0_50], %100 {strides = array<i32>} : memref<1x2x2x12x8xf32, #tpu.memory_space<vmem>>, vector<1x1x1x12x8xf32>,
    %101 = vector.extract_strided_slice %5 {offsets = [0, 16], sizes = [8, 8], strides = [1, 1]} : vector<8x32xf32> to vector<8x8xf32>
    %102 = vector.extract_strided_slice %5 {offsets = [0, 24], sizes = [8, 8], strides = [1, 1]} : vector<8x32xf32> to vector<8x8xf32>
    %103 = tpu.concatenate %101, %102 in 0 : vector<8x8xf32>, vector<8x8xf32> -> vector<16x8xf32>
    %104 = vector.extract_strided_slice %103 {offsets = [0, 0], sizes = [16, 4], strides = [1, 1]} : vector<16x8xf32> to vector<16x4xf32>
    %105 = vector.extract_strided_slice %103 {offsets = [0, 4], sizes = [16, 4], strides = [1, 1]} : vector<16x8xf32> to vector<16x4xf32>
    %106 = arith.mulf %104, %17 : vector<16x4xf32>
    %107 = arith.mulf %105, %18 : vector<16x4xf32>
    %108 = arith.subf %106, %107 : vector<16x4xf32>
    %109 = arith.mulf %105, %17 : vector<16x4xf32>
    %110 = arith.mulf %104, %18 : vector<16x4xf32>
    %111 = arith.addf %109, %110 : vector<16x4xf32>
    %112 = tpu.concatenate %108, %111 in 1 : vector<16x4xf32>, vector<16x4xf32> -> vector<16x8xf32>
    %113 = tpu.transpose %91, [1, 0] : vector<12x8xf32> -> vector<8x12xf32>
    %cst_51 = arith.constant dense<0.000000e+00> : vector<16x12xf32>
    %114 = tpu.matmul %112, %113, %cst_51 {dimension_numbers = #tpu.dot_dimension_numbers<[1], [0], [0], [1], [0, 0, 1, 1], [], []>} : vector<16x8xf32>, vector<8x12xf32>, vector<16x12xf32> -> vector<16x12xf32>
    %115 = arith.addf %114, %19 : vector<16x12xf32>
    %cst_52 = arith.constant dense<0xFF800000> : vector<16xf32>
    %116 = vector.multi_reduction <maximumf>, %115, %cst_52 [1] : vector<16x12xf32> to vector<16xf32>
    %117 = vector.shape_cast %116 : vector<16xf32> to vector<16x1xf32>
    %118 = vector.broadcast %117 : vector<16x1xf32> to vector<16x12xf32>
    %119 = arith.subf %115, %118 : vector<16x12xf32>
    %120 = math.exp %119 : vector<16x12xf32>
    %cst_53 = arith.constant dense<0.000000e+00> : vector<16xf32>
    %121 = vector.multi_reduction <add>, %120, %cst_53 [1] : vector<16x12xf32> to vector<16xf32>
    %122 = vector.shape_cast %121 : vector<16xf32> to vector<16x1xf32>
    %123 = tpu.reciprocal %122 {approx = true} : vector<16x1xf32> -> vector<16x1xf32>
    %124 = vector.broadcast %123 : vector<16x1xf32> to vector<16x12xf32>
    %125 = arith.mulf %120, %124 : vector<16x12xf32>
    %cst_54 = arith.constant dense<0.000000e+00> : vector<16x8xf32>
    %126 = tpu.matmul %125, %94, %cst_54 {dimension_numbers = #tpu.dot_dimension_numbers<[1], [0], [0], [1], [0, 0, 1, 1], [], []>} : vector<16x12xf32>, vector<12x8xf32>, vector<16x8xf32> -> vector<16x8xf32>
    %127 = vector.extract_strided_slice %126 {offsets = [0, 0], sizes = [8, 8], strides = [1, 1]} : vector<16x8xf32> to vector<8x8xf32>
    %128 = vector.extract_strided_slice %16 {offsets = [16, 0], sizes = [8, 32], strides = [1, 1]} : vector<32x32xf32> to vector<8x32xf32>
    %cst_55 = arith.constant dense<0.000000e+00> : vector<8x32xf32>
    %129 = tpu.matmul %127, %128, %cst_55 {dimension_numbers = #tpu.dot_dimension_numbers<[1], [0], [0], [1], [0, 0, 1, 1], [], []>} : vector<8x8xf32>, vector<8x32xf32>, vector<8x32xf32> -> vector<8x32xf32>
    %130 = arith.addf %77, %129 : vector<8x32xf32>
    %131 = vector.extract_strided_slice %126 {offsets = [8, 0], sizes = [8, 8], strides = [1, 1]} : vector<16x8xf32> to vector<8x8xf32>
    %132 = vector.extract_strided_slice %16 {offsets = [24, 0], sizes = [8, 32], strides = [1, 1]} : vector<32x32xf32> to vector<8x32xf32>
    %cst_56 = arith.constant dense<0.000000e+00> : vector<8x32xf32>
    %133 = tpu.matmul %131, %132, %cst_56 {dimension_numbers = #tpu.dot_dimension_numbers<[1], [0], [0], [1], [0, 0, 1, 1], [], []>} : vector<8x8xf32>, vector<8x32xf32>, vector<8x32xf32> -> vector<8x32xf32>
    %134 = arith.addf %130, %133 : vector<8x32xf32>
    %c0_57 = arith.constant 0 : index
    %c0_58 = arith.constant 0 : index
    %c0_59 = arith.constant 0 : index
    %135 = vector.load %arg10[%c0_57, %c0_58, %c0_59] : memref<1x8x32xf32, #tpu.memory_space<vmem>>, vector<1x8x32xf32>
    %136 = vector.shape_cast %135 : vector<1x8x32xf32> to vector<8x32xf32>
    %137 = vector.shape_cast %134 : vector<8x32xf32> to vector<1x8x32xf32>
    tpu.vector_store %arg10[%c0_57, %c0_58, %c0_59], %137 {strides = array<i32>} : memref<1x8x32xf32, #tpu.memory_space<vmem>>, vector<1x8x32xf32>,
    return
  }
  func.func @transform_0(%arg0: i32) -> (i32, i32, i32) {
    %c0_i32 = arith.constant 0 : i32
    %c0_i32_0 = arith.constant 0 : i32
    %c0_i32_1 = arith.constant 0 : i32
    return %arg0, %c0_i32, %c0_i32_0 : i32, i32, i32
  }
  func.func @transform_1(%arg0: i32) -> (i32, i32) {
    %c0_i32 = arith.constant 0 : i32
    %c0_i32_0 = arith.constant 0 : i32
    %c0_i32_1 = arith.constant 0 : i32
    return %c0_i32, %c0_i32_0 : i32, i32
  }
  func.func @transform_2(%arg0: i32) -> (i32, i32) {
    %c0_i32 = arith.constant 0 : i32
    %c0_i32_0 = arith.constant 0 : i32
    %c0_i32_1 = arith.constant 0 : i32
    return %c0_i32, %c0_i32_0 : i32, i32
  }
  func.func @transform_3(%arg0: i32) -> (i32, i32) {
    %c0_i32 = arith.constant 0 : i32
    %c0_i32_0 = arith.constant 0 : i32
    %c0_i32_1 = arith.constant 0 : i32
    return %c0_i32, %c0_i32_0 : i32, i32
  }
  func.func @transform_4(%arg0: i32) -> (i32, i32) {
    %c0_i32 = arith.constant 0 : i32
    %c0_i32_0 = arith.constant 0 : i32
    %c0_i32_1 = arith.constant 0 : i32
    return %c0_i32, %c0_i32_0 : i32, i32
  }
  func.func @transform_5(%arg0: i32) -> (i32, i32) {
    %c0_i32 = arith.constant 0 : i32
    %c0_i32_0 = arith.constant 0 : i32
    %c0_i32_1 = arith.constant 0 : i32
    return %c0_i32, %c0_i32_0 : i32, i32
  }
  func.func @transform_6(%arg0: i32) -> (i32, i32) {
    %c0_i32 = arith.constant 0 : i32
    %c0_i32_0 = arith.constant 0 : i32
    %c0_i32_1 = arith.constant 0 : i32
    return %c0_i32, %c0_i32_0 : i32, i32
  }
  func.func @transform_7(%arg0: i32) -> (i32, i32, i32, i32, i32) {
    %c0_i32 = arith.constant 0 : i32
    %c0_i32_0 = arith.constant 0 : i32
    %c0_i32_1 = arith.constant 0 : i32
    %c0_i32_2 = arith.constant 0 : i32
    %c0_i32_3 = arith.constant 0 : i32
    return %arg0, %c0_i32, %c0_i32_0, %c0_i32_1, %c0_i32_2 : i32, i32, i32, i32, i32
  }
  func.func @transform_8(%arg0: i32) -> (i32, i32, i32) {
    %c0_i32 = arith.constant 0 : i32
    %c0_i32_0 = arith.constant 0 : i32
    %c0_i32_1 = arith.constant 0 : i32
    return %arg0, %c0_i32, %c0_i32_0 : i32, i32, i32
  }
  func.func @transform_9(%arg0: i32) -> (i32, i32, i32) {
    %c0_i32 = arith.constant 0 : i32
    %c0_i32_0 = arith.constant 0 : i32
    %c0_i32_1 = arith.constant 0 : i32
    return %arg0, %c0_i32, %c0_i32_0 : i32, i32, i32
  }
  func.func @transform_10(%arg0: i32) -> (i32, i32, i32, i32, i32) {
    %c0_i32 = arith.constant 0 : i32
    %c0_i32_0 = arith.constant 0 : i32
    %c0_i32_1 = arith.constant 0 : i32
    %c0_i32_2 = arith.constant 0 : i32
    %c0_i32_3 = arith.constant 0 : i32
    return %arg0, %c0_i32, %c0_i32_0, %c0_i32_1, %c0_i32_2 : i32, i32, i32, i32, i32
  }
}

</mosaic_0001>

<llo_original>
// kernel: tpu_custom_call.1
$region0: #{tpu_custom_call.1}
  #allocation0 [shape = 'u32[]', space=smem, size = 0x4, offset = 0x4, fixed_abs, tag = 'smem constant byte address 0x4 - core index']
  #allocation1 [shape = 'u32[144,128]{1,0:T(1,128)}', space=vmem, size = 0x12000, scoped, tag = 'internal scratch']
  %s0 = inlined_call_operand.hbm [shape: f32[2,8,32], index: 0, kind: input, shape index: {}]
  %s1 = inlined_call_operand.vmem [shape: f32[32,32], index: 1, kind: input, shape index: {}]
  %s2 = inlined_call_operand.vmem [shape: f32[32,16], index: 2, kind: input, shape index: {}]
  %s3 = inlined_call_operand.vmem [shape: f32[32,16], index: 3, kind: input, shape index: {}]
  %s4 = inlined_call_operand.vmem [shape: f32[32,32], index: 4, kind: input, shape index: {}]
  %s5 = inlined_call_operand.vmem [shape: f32[8,4], index: 5, kind: input, shape index: {}]
  %s6 = inlined_call_operand.vmem [shape: f32[8,4], index: 6, kind: input, shape index: {}]
  %s7 = inlined_call_operand.vmem [shape: f32[2,2,2,4,8], index: 7, kind: input, shape index: {}]
  %s8 = inlined_call_operand.vmem [shape: f32[2,8,12], index: 8, kind: input, shape index: {}]
  %s9 = inlined_call_operand.hbm [shape: f32[2,8,32], index: 9, kind: output, shape index: {0}]
  %s10 = inlined_call_operand.vmem [shape: f32[2,2,2,12,8], index: 10, kind: output, shape index: {1}]
  %11 = xla_tuple %s9, %s10
  %s12 = sld [smem:[#allocation0]]
  $region81: #{tpu_custom_call.1} parent=0
    _
  %s14 = ssub.s32 1, %s12
  %s15 = scalar_select 0, %s14, %s12
  $region1: #{tpu_custom_call.1} parent=0
    #allocation2 [shape = 'u8[8192]{0}', space=vmem, size = 0x2000, scoped, tag = 'input window, operand 0']
    #allocation3 [shape = 's32[2]{0}', space=sflag, size = 0x8, scoped, tag = 'scoped memory for tpu_custom_call.1']
    #allocation4 [shape = 's32[2]{0}', space=sflag, size = 0x8, scoped, tag = 'scoped memory for tpu_custom_call.1']
    #allocation5 [shape = 'u8[8192]{0}', space=vmem, size = 0x2000, scoped, tag = 'output window, operand 0']
    %16 = vsyncpa [#allocation3], 0
    %s17 = scalar_lea.sflag [#allocation3], 1
    %18 = vsyncpa %s17, 0
    %19 = vsyncpa [#allocation4], 0
    %s20 = scalar_lea.sflag [#allocation4], 1
    %21 = vsyncpa %s20, 0
    loop: start=0, step=1, limit=4
    $region2: #{tpu_custom_call.1} parent=1 // loop_pre_header
      _
    $region3: #{tpu_custom_call.1} parent=1 // loop_header
      %s23 = sphi 0, %s27
      %p24 = scmp.ge.s32.totalorder %s23, 4
      %s33 = sphi 0, %s35
      %s36 = sphi 0, %s33
      %s37 = sphi 0, %s36
      %s53 = sphi 0, %s37
      %s57 = sphi 0, %s57
      %s59 = sphi 0, %s57
      %s60 = sphi 0, %s59
      %s74 = sphi 0, %s60
      %s78 = sphi 0, %s78
      %s80 = sphi 0, %s78
      %s81 = sphi 0, %s80
      %s95 = sphi 0, %s81
      %s99 = sphi 0, %s99
      %s101 = sphi 0, %s99
      %s102 = sphi 0, %s101
      %s116 = sphi 0, %s102
      %s120 = sphi 0, %s120
      %s122 = sphi 0, %s120
      %s123 = sphi 0, %s122
      %s137 = sphi 0, %s123
      %s141 = sphi 0, %s141
      %s143 = sphi 0, %s141
      %s144 = sphi 0, %s143
      %s158 = sphi 0, %s144
      %s162 = sphi 0, %s162
      %s164 = sphi 0, %s162
      %s165 = sphi 0, %s164
      %s179 = sphi 0, %s165
      %s185 = sphi 0, %s187
      %s188 = sphi 0, %s185
      %s189 = sphi 0, %s188
      %s205 = sphi 0, %s189
      %s211 = sphi 0, %s213
      %s214 = sphi 0, %s211
      %s215 = sphi 0, %s214
      %s231 = sphi 0, %s215
      %s237 = sphi 0, %s239
      %s240 = sphi 0, %s237
      %s241 = sphi 0, %s240
      %s257 = sphi 0, %s241
      %s263 = sphi 0, %s265
      %s266 = sphi 0, %s263
      %s267 = sphi 0, %s266
      %s283 = sphi 0, %s267
    $region4: #{tpu_custom_call.1} parent=1 // loop_header_branch
      %26 = sbr.rel (%p24) target = $region8
    $region5: #{tpu_custom_call.1} parent=1 // loop_body
      %s28 = ssub.s32 %s23, 1
      %s29 = ssub.s32 %s23, 2
      %s30 = sadd.s32 %s23, 1
      %s31 = ssub.s32 %s23, %s30
      %p32 = scmp.eq.s32.totalorder %s31, 0
      %s34 = sadd.s32 %s33, 1
      %s35 = scalar_select %p32, %s33, %s34
      %p38 = pneg %p32
      %p39 = scmp.eq.s32.totalorder %s23, 1
      %p40 = por %p38, %p39
      %p41 = scmp.ne.s32.totalorder %s33, %s36
      %p42 = scmp.eq.s32.totalorder %s23, 0
      %p43 = por %p41, %p42
      %p44 = scmp.ne.s32.totalorder %s33, %s36
      %p45 = scmp.eq.s32.totalorder %s28, 1
      %p46 = por %p44, %p45
      %p47 = scmp.ne.s32.totalorder %s36, %s37
      %p48 = scmp.eq.s32.totalorder %s28, 0
      %p49 = por %p47, %p48
      %p50 = scmp.ne.s32.totalorder %s36, %s37
      %p51 = scmp.eq.s32.totalorder %s29, 1
      %p52 = por %p50, %p51
      %p54 = scmp.ne.s32.totalorder %s37, %s53
      %p55 = scmp.eq.s32.totalorder %s29, 0
      %p56 = por %p54, %p55
      %s58 = sadd.s32 %s57, 1
      %p61 = scmp.eq.s32.totalorder %s23, 1
      %p62 = scmp.ne.s32.totalorder %s57, %s59
      %p63 = scmp.eq.s32.totalorder %s23, 0
      %p64 = por %p62, %p63
      %p65 = scmp.ne.s32.totalorder %s57, %s59
      %p66 = scmp.eq.s32.totalorder %s28, 1
      %p67 = por %p65, %p66
      %p68 = scmp.ne.s32.totalorder %s59, %s60
      %p69 = scmp.eq.s32.totalorder %s28, 0
      %p70 = por %p68, %p69
      %p71 = scmp.ne.s32.totalorder %s59, %s60
      %p72 = scmp.eq.s32.totalorder %s29, 1
      %p73 = por %p71, %p72
      %p75 = scmp.ne.s32.totalorder %s60, %s74
      %p76 = scmp.eq.s32.totalorder %s29, 0
      %p77 = por %p75, %p76
      %s79 = sadd.s32 %s78, 1
      %p82 = scmp.eq.s32.totalorder %s23, 1
      %p83 = scmp.ne.s32.totalorder %s78, %s80
      %p84 = scmp.eq.s32.totalorder %s23, 0
      %p85 = por %p83, %p84
      %p86 = scmp.ne.s32.totalorder %s78, %s80
      %p87 = scmp.eq.s32.totalorder %s28, 1
      %p88 = por %p86, %p87
      %p89 = scmp.ne.s32.totalorder %s80, %s81
      %p90 = scmp.eq.s32.totalorder %s28, 0
      %p91 = por %p89, %p90
      %p92 = scmp.ne.s32.totalorder %s80, %s81
      %p93 = scmp.eq.s32.totalorder %s29, 1
      %p94 = por %p92, %p93
      %p96 = scmp.ne.s32.totalorder %s81, %s95
      %p97 = scmp.eq.s32.totalorder %s29, 0
      %p98 = por %p96, %p97
      %s100 = sadd.s32 %s99, 1
      %p103 = scmp.eq.s32.totalorder %s23, 1
      %p104 = scmp.ne.s32.totalorder %s99, %s101
      %p105 = scmp.eq.s32.totalorder %s23, 0
      %p106 = por %p104, %p105
      %p107 = scmp.ne.s32.totalorder %s99, %s101
      %p108 = scmp.eq.s32.totalorder %s28, 1
      %p109 = por %p107, %p108
      %p110 = scmp.ne.s32.totalorder %s101, %s102
      %p111 = scmp.eq.s32.totalorder %s28, 0
      %p112 = por %p110, %p111
      %p113 = scmp.ne.s32.totalorder %s101, %s102
      %p114 = scmp.eq.s32.totalorder %s29, 1
      %p115 = por %p113, %p114
      %p117 = scmp.ne.s32.totalorder %s102, %s116
      %p118 = scmp.eq.s32.totalorder %s29, 0
      %p119 = por %p117, %p118
      %s121 = sadd.s32 %s120, 1
      %p124 = scmp.eq.s32.totalorder %s23, 1
      %p125 = scmp.ne.s32.totalorder %s120, %s122
      %p126 = scmp.eq.s32.totalorder %s23, 0
      %p127 = por %p125, %p126
      %p128 = scmp.ne.s32.totalorder %s120, %s122
      %p129 = scmp.eq.s32.totalorder %s28, 1
      %p130 = por %p128, %p129
      %p131 = scmp.ne.s32.totalorder %s122, %s123
      %p132 = scmp.eq.s32.totalorder %s28, 0
      %p133 = por %p131, %p132
      %p134 = scmp.ne.s32.totalorder %s122, %s123
      %p135 = scmp.eq.s32.totalorder %s29, 1
      %p136 = por %p134, %p135
      %p138 = scmp.ne.s32.totalorder %s123, %s137
      %p139 = scmp.eq.s32.totalorder %s29, 0
      %p140 = por %p138, %p139
      %s142 = sadd.s32 %s141, 1
      %p145 = scmp.eq.s32.totalorder %s23, 1
      %p146 = scmp.ne.s32.totalorder %s141, %s143
      %p147 = scmp.eq.s32.totalorder %s23, 0
      %p148 = por %p146, %p147
      %p149 = scmp.ne.s32.totalorder %s141, %s143
      %p150 = scmp.eq.s32.totalorder %s28, 1
      %p151 = por %p149, %p150
      %p152 = scmp.ne.s32.totalorder %s143, %s144
      %p153 = scmp.eq.s32.totalorder %s28, 0
      %p154 = por %p152, %p153
      %p155 = scmp.ne.s32.totalorder %s143, %s144
      %p156 = scmp.eq.s32.totalorder %s29, 1
      %p157 = por %p155, %p156
      %p159 = scmp.ne.s32.totalorder %s144, %s158
      %p160 = scmp.eq.s32.totalorder %s29, 0
      %p161 = por %p159, %p160
      %s163 = sadd.s32 %s162, 1
      %p166 = scmp.eq.s32.totalorder %s23, 1
      %p167 = scmp.ne.s32.totalorder %s162, %s164
      %p168 = scmp.eq.s32.totalorder %s23, 0
      %p169 = por %p167, %p168
      %p170 = scmp.ne.s32.totalorder %s162, %s164
      %p171 = scmp.eq.s32.totalorder %s28, 1
      %p172 = por %p170, %p171
      %p173 = scmp.ne.s32.totalorder %s164, %s165
      %p174 = scmp.eq.s32.totalorder %s28, 0
      %p175 = por %p173, %p174
      %p176 = scmp.ne.s32.totalorder %s164, %s165
      %p177 = scmp.eq.s32.totalorder %s29, 1
      %p178 = por %p176, %p177
      %p180 = scmp.ne.s32.totalorder %s165, %s179
      %p181 = scmp.eq.s32.totalorder %s29, 0
      %p182 = por %p180, %p181
      %s183 = ssub.s32 %s23, %s30
      %p184 = scmp.eq.s32.totalorder %s183, 0
      %s186 = sadd.s32 %s185, 1
      %s187 = scalar_select %p184, %s185, %s186
      %p190 = pneg %p184
      %p191 = scmp.eq.s32.totalorder %s23, 1
      %p192 = por %p190, %p191
      %p193 = scmp.ne.s32.totalorder %s185, %s188
      %p194 = scmp.eq.s32.totalorder %s23, 0
      %p195 = por %p193, %p194
      %p196 = scmp.ne.s32.totalorder %s185, %s188
      %p197 = scmp.eq.s32.totalorder %s28, 1
      %p198 = por %p196, %p197
      %p199 = scmp.ne.s32.totalorder %s188, %s189
      %p200 = scmp.eq.s32.totalorder %s28, 0
      %p201 = por %p199, %p200
      %p202 = scmp.ne.s32.totalorder %s188, %s189
      %p203 = scmp.eq.s32.totalorder %s29, 1
      %p204 = por %p202, %p203
      %p206 = scmp.ne.s32.totalorder %s189, %s205
      %p207 = scmp.eq.s32.totalorder %s29, 0
      %p208 = por %p206, %p207
      %s209 = ssub.s32 %s23, %s30
      %p210 = scmp.eq.s32.totalorder %s209, 0
      %s212 = sadd.s32 %s211, 1
      %s213 = scalar_select %p210, %s211, %s212
      %p216 = pneg %p210
      %p217 = scmp.eq.s32.totalorder %s23, 1
      %p218 = por %p216, %p217
      %p219 = scmp.ne.s32.totalorder %s211, %s214
      %p220 = scmp.eq.s32.totalorder %s23, 0
      %p221 = por %p219, %p220
      %p222 = scmp.ne.s32.totalorder %s211, %s214
      %p223 = scmp.eq.s32.totalorder %s28, 1
      %p224 = por %p222, %p223
      %p225 = scmp.ne.s32.totalorder %s214, %s215
      %p226 = scmp.eq.s32.totalorder %s28, 0
      %p227 = por %p225, %p226
      %p228 = scmp.ne.s32.totalorder %s214, %s215
      %p229 = scmp.eq.s32.totalorder %s29, 1
      %p230 = por %p228, %p229
      %p232 = scmp.ne.s32.totalorder %s215, %s231
      %p233 = scmp.eq.s32.totalorder %s29, 0
      %p234 = por %p232, %p233
      %s235 = ssub.s32 %s23, %s30
      %p236 = scmp.eq.s32.totalorder %s235, 0
      %s238 = sadd.s32 %s237, 1
      %s239 = scalar_select %p236, %s237, %s238
      %p242 = pneg %p236
      %p243 = scmp.eq.s32.totalorder %s23, 1
      %p244 = por %p242, %p243
      %p245 = scmp.ne.s32.totalorder %s237, %s240
      %p246 = scmp.eq.s32.totalorder %s23, 0
      %p247 = por %p245, %p246
      %p248 = scmp.ne.s32.totalorder %s237, %s240
      %p249 = scmp.eq.s32.totalorder %s28, 1
      %p250 = por %p248, %p249
      %p251 = scmp.ne.s32.totalorder %s240, %s241
      %p252 = scmp.eq.s32.totalorder %s28, 0
      %p253 = por %p251, %p252
      %p254 = scmp.ne.s32.totalorder %s240, %s241
      %p255 = scmp.eq.s32.totalorder %s29, 1
      %p256 = por %p254, %p255
      %p258 = scmp.ne.s32.totalorder %s241, %s257
      %p259 = scmp.eq.s32.totalorder %s29, 0
      %p260 = por %p258, %p259
      %s261 = ssub.s32 %s23, %s30
      %p262 = scmp.eq.s32.totalorder %s261, 0
      %s264 = sadd.s32 %s263, 1
      %s265 = scalar_select %p262, %s263, %s264
      %p268 = pneg %p262
      %p269 = scmp.eq.s32.totalorder %s23, 1
      %p270 = por %p268, %p269
      %p271 = scmp.ne.s32.totalorder %s263, %s266
      %p272 = scmp.eq.s32.totalorder %s23, 0
      %p273 = por %p271, %p272
      %p274 = scmp.ne.s32.totalorder %s263, %s266
      %p275 = scmp.eq.s32.totalorder %s28, 1
      %p276 = por %p274, %p275
      %p277 = scmp.ne.s32.totalorder %s266, %s267
      %p278 = scmp.eq.s32.totalorder %s28, 0
      %p279 = por %p277, %p278
      %p280 = scmp.ne.s32.totalorder %s266, %s267
      %p281 = scmp.eq.s32.totalorder %s29, 1
      %p282 = por %p280, %p281
      %p284 = scmp.ne.s32.totalorder %s267, %s283
      %p285 = scmp.eq.s32.totalorder %s29, 0
      %p286 = por %p284, %p285
      %p287 = scmp.le.s32.totalorder 1, %s23
      %p288 = scmp.lt.s32.totalorder %s23, 3
      %p289 = pnand %p287, %p288
      %p290 = pneg %p289
      // Predicated region
      $region9: #{tpu_custom_call.1} parent=5 // pred_check
        _
      $region10: #{tpu_custom_call.1} parent=5 // pred_check_branch
        %292 = sbr.rel (%p289) target = $region12
      $region11: #{tpu_custom_call.1} parent=5 // pred_region
        %s293 = ssub.s32 %s23, 1
        // Predicated region
        $region13: #{tpu_custom_call.1} parent=11 // pred_check
          %p294 = pneg %p70
        $region14: #{tpu_custom_call.1} parent=11 // pred_check_branch
          %296 = sbr.rel (%p294) target = $region16
        $region15: #{tpu_custom_call.1} parent=11 // pred_region
          _
        $region16: #{tpu_custom_call.1} parent=11 // pred_fallthru
          _
        // Predicated region
        $region17: #{tpu_custom_call.1} parent=11 // pred_check
          %p297 = pneg %p91
        $region18: #{tpu_custom_call.1} parent=11 // pred_check_branch
          %299 = sbr.rel (%p297) target = $region20
        $region19: #{tpu_custom_call.1} parent=11 // pred_region
          _
        $region20: #{tpu_custom_call.1} parent=11 // pred_fallthru
          _
        // Predicated region
        $region21: #{tpu_custom_call.1} parent=11 // pred_check
          %p300 = pneg %p112
        $region22: #{tpu_custom_call.1} parent=11 // pred_check_branch
          %302 = sbr.rel (%p300) target = $region24
        $region23: #{tpu_custom_call.1} parent=11 // pred_region
          _
        $region24: #{tpu_custom_call.1} parent=11 // pred_fallthru
          _
        // Predicated region
        $region25: #{tpu_custom_call.1} parent=11 // pred_check
          %p303 = pneg %p133
        $region26: #{tpu_custom_call.1} parent=11 // pred_check_branch
          %305 = sbr.rel (%p303) target = $region28
        $region27: #{tpu_custom_call.1} parent=11 // pred_region
          _
        $region28: #{tpu_custom_call.1} parent=11 // pred_fallthru
          _
        // Predicated region
        $region29: #{tpu_custom_call.1} parent=11 // pred_check
          %p306 = pneg %p154
        $region30: #{tpu_custom_call.1} parent=11 // pred_check_branch
          %308 = sbr.rel (%p306) target = $region32
        $region31: #{tpu_custom_call.1} parent=11 // pred_region
          _
        $region32: #{tpu_custom_call.1} parent=11 // pred_fallthru
          _
        // Predicated region
        $region33: #{tpu_custom_call.1} parent=11 // pred_check
          %p309 = pneg %p175
        $region34: #{tpu_custom_call.1} parent=11 // pred_check_branch
          %311 = sbr.rel (%p309) target = $region36
        $region35: #{tpu_custom_call.1} parent=11 // pred_region
          _
        $region36: #{tpu_custom_call.1} parent=11 // pred_fallthru
          _
      $region12: #{tpu_custom_call.1} parent=5 // pred_fallthru
        _
      %p312 = scmp.lt.s32.totalorder %s23, 2
      // Predicated region
      $region37: #{tpu_custom_call.1} parent=5 // pred_check
        %p313 = pneg %p312
      $region38: #{tpu_custom_call.1} parent=5 // pred_check_branch
        %315 = sbr.rel (%p313) target = $region40
      $region39: #{tpu_custom_call.1} parent=5 // pred_region
        // Predicated region
        $region41: #{tpu_custom_call.1} parent=39 // pred_check
          %p316 = pneg %p43
        $region42: #{tpu_custom_call.1} parent=39 // pred_check_branch
          %318 = sbr.rel (%p316) target = $region44
        $region43: #{tpu_custom_call.1} parent=39 // pred_region
          %s319 = sand.u32 %s33, 1
          %s320 = scalar_lea.sflag [#allocation3], %s319
          %s321 = sand.u32 %s33, 1
          %s322 = smul.addr %s321, 8
          %s323 = scalar_lea.vmem [#allocation2], %s322
          %s325 = ssub.s32 128, 128
          %326 = vsyncadd %s320, %s325
          %s327 = smul.addr %s23, 128
          %s328 = scalar_lea.hbm %s0, %s327
          %s330 = sshll.u32 %s323, 4
          %s331 = int_to_ptr.vmem [resolvable:$true] %s330
          %333 = dma.hbm_to_vmem [thread:$0]  %s328, 128, %s331, %s320
        $region44: #{tpu_custom_call.1} parent=39 // pred_fallthru
          _
        // Predicated region
        $region45: #{tpu_custom_call.1} parent=39 // pred_check
          %p334 = pneg %p195
        $region46: #{tpu_custom_call.1} parent=39 // pred_check_branch
          %336 = sbr.rel (%p334) target = $region48
        $region47: #{tpu_custom_call.1} parent=39 // pred_region
          %p337 = scmp.lt.s32.totalorder %s23, 1
          %s338 = scalar_select %p337, %s23, 1
          %s339 = smul.addr %s338, 4
          %s340 = smul.addr %s339, 4
          %s341 = scalar_lea.vmem %s7, %s340
        $region48: #{tpu_custom_call.1} parent=39 // pred_fallthru
          _
        // Predicated region
        $region49: #{tpu_custom_call.1} parent=39 // pred_check
          %p342 = pneg %p221
        $region50: #{tpu_custom_call.1} parent=39 // pred_check_branch
          %344 = sbr.rel (%p342) target = $region52
        $region51: #{tpu_custom_call.1} parent=39 // pred_region
          %p345 = scmp.lt.s32.totalorder %s23, 1
          %s346 = scalar_select %p345, %s23, 1
          %s347 = smul.addr %s346, 8
          %s348 = scalar_lea.vmem %s8, %s347
        $region52: #{tpu_custom_call.1} parent=39 // pred_fallthru
          _
      $region40: #{tpu_custom_call.1} parent=5 // pred_fallthru
        _
      %p349 = scmp.le.s32.totalorder 1, %s23
      %p350 = scmp.lt.s32.totalorder %s23, 3
      %p351 = pnand %p349, %p350
      %p352 = pneg %p351
      // Predicated region
      $region53: #{tpu_custom_call.1} parent=5 // pred_check
        _
      $region54: #{tpu_custom_call.1} parent=5 // pred_check_branch
        %354 = sbr.rel (%p351) target = $region56
      $region55: #{tpu_custom_call.1} parent=5 // pred_region
        %s355 = ssub.s32 %s23, 1
        %s356 = sand.u32 %s36, 1
        %s357 = scalar_lea.sflag [#allocation3], %s356
        %s358 = sand.u32 %s36, 1
        %s359 = smul.addr %s358, 8
        %s360 = scalar_lea.vmem [#allocation2], %s359
        // Predicated region
        $region57: #{tpu_custom_call.1} parent=55 // pred_check
          %p361 = pneg %p49
        $region58: #{tpu_custom_call.1} parent=55 // pred_check_branch
          %363 = sbr.rel (%p361) target = $region60
        $region59: #{tpu_custom_call.1} parent=55 // pred_region
          %364 = dma.done %s357, 128
        $region60: #{tpu_custom_call.1} parent=55 // pred_fallthru
          _
        %s365 = sand.u32 %s36, 1
        %s366 = scalar_lea.sflag [#allocation3], %s365
        %s367 = sand.u32 %s36, 1
        %s368 = smul.addr %s367, 8
        %s369 = scalar_lea.vmem [#allocation2], %s368
        %p370 = pneg %p49
        %p371 = pneg %p46
        %p372 = pneg %p70
        %p373 = pneg %p67
        %p374 = pneg %p91
        %p375 = pneg %p88
        %p376 = pneg %p112
        %p377 = pneg %p109
        %p378 = pneg %p133
        %p379 = pneg %p130
        %p380 = pneg %p154
        %p381 = pneg %p151
        %p382 = pneg %p175
        %p383 = pneg %p172
        %p384 = scmp.lt.s32.totalorder %s28, 1
        %s385 = scalar_select %p384, %s28, 1
        %s386 = smul.addr %s385, 4
        %s387 = smul.addr %s386, 4
        %s388 = scalar_lea.vmem %s7, %s387
        %p389 = pneg %p201
        %p390 = pneg %p198
        %p391 = scmp.lt.s32.totalorder %s28, 1
        %s392 = scalar_select %p391, %s28, 1
        %s393 = smul.addr %s392, 8
        %s394 = scalar_lea.vmem %s8, %s393
        %p395 = pneg %p227
        %p396 = pneg %p224
        %p397 = pneg %p253
        %p398 = pneg %p250
        %s399 = sand.u32 %s240, 1
        %s400 = scalar_lea.sflag [#allocation4], %s399
        %s401 = sand.u32 %s240, 1
        %s402 = smul.addr %s401, 8
        %s403 = scalar_lea.vmem [#allocation5], %s402
        %p404 = pneg %p279
        %p405 = pneg %p276
        %p406 = scmp.lt.s32.totalorder %s28, 1
        %s407 = scalar_select %p406, %s28, 1
        %s408 = smul.addr %s407, 8
        %s409 = smul.addr %s408, 8
        %s410 = scalar_lea.vmem %s10, %s409
        %p411 = scmp.lt.s32.totalorder %s28, 1
        %s412 = scalar_select %p411, %s28, 1
        %s413 = smul.addr %s412, 4
        %s414 = smul.addr %s413, 4
        %s415 = scalar_lea.vmem %s7, %s414
        %p416 = scmp.lt.s32.totalorder %s28, 1
        %s417 = scalar_select %p416, %s28, 1
        %s418 = smul.addr %s417, 8
        %s419 = scalar_lea.vmem %s8, %s418
        %p420 = scmp.lt.s32.totalorder %s28, 1
        %s421 = scalar_select %p420, %s28, 1
        %s422 = smul.addr %s421, 8
        %s423 = smul.addr %s422, 8
        %s424 = scalar_lea.vmem %s10, %s423
        %v425 = vld [vmem:[%s360] sm:$0xff]
        %v426 = vld [vmem:[%s1] sm:$0xff]
        %v427 = vld [vmem:[%s1 + $0x8] sm:$0xff]
        %v428 = vld [vmem:[%s1 + $0x10] sm:$0xff]
        %v429 = vld [vmem:[%s1 + $0x18] sm:$0xff]
        %vm430 = vcmask 261120
        %v432 = vsel %vm430, %v425, 0
        %434 = vmatprep.subr.mxu0 0.0
        %435 = vmatpush1.msra.mxu0 %v426
        %436 = vmatprep.subr.mxu0 0.0
        %437 = vmatpush1.msra.mxu0 %v427
        %438 = vmatprep.subr.mxu0 0.0
        %439 = vmatpush1.msra.mxu0 %v428
        %440 = vmatprep.subr.mxu0 0.0
        %441 = vmatpush1.msra.mxu0 %v429
        %442 = vmatprep.subr.mxu0 0.0
        %443 = vmatpush1.msra.mxu0 0.0
        %444 = vmatprep.subr.mxu0 0.0
        %445 = vmatpush1.msra.mxu0 0.0
        %446 = vmatprep.subr.mxu0 0.0
        %447 = vmatpush1.msra.mxu0 0.0
        %448 = vmatprep.subr.mxu0 0.0
        %449 = vmatpush1.msra.mxu0 0.0
        %450 = vmatprep.subr.mxu0 0.0
        %451 = vmatpush1.msra.mxu0 0.0
        %452 = vmatprep.subr.mxu0 0.0
        %453 = vmatpush1.msra.mxu0 0.0
        %454 = vmatprep.subr.mxu0 0.0
        %455 = vmatpush1.msra.mxu0 0.0
        %456 = vmatprep.subr.mxu0 0.0
        %457 = vmatpush1.msra.mxu0 0.0
        %458 = vmatprep.subr.mxu0 0.0
        %459 = vmatpush1.msra.mxu0 0.0
        %460 = vmatprep.subr.mxu0 0.0
        %461 = vmatpush1.msra.mxu0 0.0
        %462 = vmatprep.subr.mxu0 0.0
        %463 = vmatpush1.msra.mxu0 0.0
        %464 = vmatprep.subr.mxu0 0.0
        %465 = vmatpush1.msra.mxu0 0.0
        %466 = vmatprep.subr.mxu0 0.0
        %467 = vmatpush1.msra.mxu0 0.0
        %468 = vmatprep.subr.mxu0 0.0
        %469 = vmatpush1.msra.mxu0 0.0
        %470 = vmatprep.subr.mxu0 0.0
        %471 = vmatpush1.msra.mxu0 0.0
        %472 = vmatprep.subr.mxu0 0.0
        %473 = vmatpush1.msra.mxu0 0.0
        %474 = vmatprep.subr.mxu0 0.0
        %475 = vmatpush1.msra.mxu0 0.0
        %476 = vmatprep.subr.mxu0 0.0
        %477 = vmatpush1.msra.mxu0 0.0
        %478 = vmatprep.subr.mxu0 0.0
        %479 = vmatpush1.msra.mxu0 0.0
        %480 = vmatprep.subr.mxu0 0.0
        %481 = vmatpush1.msra.mxu0 0.0
        %482 = vmatprep.subr.mxu0 0.0
        %483 = vmatpush1.msra.mxu0 0.0
        %484 = vmatprep.subr.mxu0 0.0
        %485 = vmatpush1.msra.mxu0 0.0
        %486 = vmatprep.subr.mxu0 0.0
        %487 = vmatpush1.msra.mxu0 0.0
        %488 = vmatprep.subr.mxu0 0.0
        %489 = vmatpush1.msra.mxu0 0.0
        %490 = vmatprep.subr.mxu0 0.0
        %491 = vmatpush1.msra.mxu0 0.0
        %492 = vmatprep.subr.mxu0 0.0
        %493 = vmatpush1.msra.mxu0 0.0
        %494 = vmatprep.subr.mxu0 0.0
        %495 = vmatpush1.msra.mxu0 0.0
        %496 = vmatprep.subr.mxu0 0.0
        %497 = vmatpush1.msra.mxu0 0.0
        %498 = vmatprep.mubr.f32.mxu0 0.0
        %499 = vmatmul.mubr.f32.gmra.mrb[0].mxu0 %v432
        %v500 = vpop.f32.mrb[0].mxu0
        %v501 = vadd.f32 0.0, %v500
        %v502 = vpop.f32.mrb[0].mxu0
        %503 = vdwg.mxu0
        %v504 = vmul.f32 %v501, 0.35355338
        %v505 = vld [vmem:[%s2] sm:$0xff]
        %v506 = vld [vmem:[%s2 + $0x8] sm:$0xff]
        %v507 = vld [vmem:[%s2 + $0x10] sm:$0xff]
        %v508 = vld [vmem:[%s2 + $0x18] sm:$0xff]
        %509 = vmatprep.subr.mxu0 0.0
        %510 = vmatpush1.msra.mxu0 %v505
        %511 = vmatprep.subr.mxu0 0.0
        %512 = vmatpush1.msra.mxu0 %v506
        %513 = vmatprep.subr.mxu0 0.0
        %514 = vmatpush1.msra.mxu0 %v507
        %515 = vmatprep.subr.mxu0 0.0
        %516 = vmatpush1.msra.mxu0 %v508
        %517 = vmatprep.subr.mxu0 0.0
        %518 = vmatpush1.msra.mxu0 0.0
        %519 = vmatprep.subr.mxu0 0.0
        %520 = vmatpush1.msra.mxu0 0.0
        %521 = vmatprep.subr.mxu0 0.0
        %522 = vmatpush1.msra.mxu0 0.0
        %523 = vmatprep.subr.mxu0 0.0
        %524 = vmatpush1.msra.mxu0 0.0
        %525 = vmatprep.subr.mxu0 0.0
        %526 = vmatpush1.msra.mxu0 0.0
        %527 = vmatprep.subr.mxu0 0.0
        %528 = vmatpush1.msra.mxu0 0.0
        %529 = vmatprep.subr.mxu0 0.0
        %530 = vmatpush1.msra.mxu0 0.0
        %531 = vmatprep.subr.mxu0 0.0
        %532 = vmatpush1.msra.mxu0 0.0
        %533 = vmatprep.subr.mxu0 0.0
        %534 = vmatpush1.msra.mxu0 0.0
        %535 = vmatprep.subr.mxu0 0.0
        %536 = vmatpush1.msra.mxu0 0.0
        %537 = vmatprep.subr.mxu0 0.0
        %538 = vmatpush1.msra.mxu0 0.0
        %539 = vmatprep.subr.mxu0 0.0
        %540 = vmatpush1.msra.mxu0 0.0
        %541 = vmatprep.subr.mxu0 0.0
        %542 = vmatpush1.msra.mxu0 0.0
        %543 = vmatprep.subr.mxu0 0.0
        %544 = vmatpush1.msra.mxu0 0.0
        %545 = vmatprep.subr.mxu0 0.0
        %546 = vmatpush1.msra.mxu0 0.0
        %547 = vmatprep.subr.mxu0 0.0
        %548 = vmatpush1.msra.mxu0 0.0
        %549 = vmatprep.subr.mxu0 0.0
        %550 = vmatpush1.msra.mxu0 0.0
        %551 = vmatprep.subr.mxu0 0.0
        %552 = vmatpush1.msra.mxu0 0.0
        %553 = vmatprep.subr.mxu0 0.0
        %554 = vmatpush1.msra.mxu0 0.0
        %555 = vmatprep.subr.mxu0 0.0
        %556 = vmatpush1.msra.mxu0 0.0
        %557 = vmatprep.subr.mxu0 0.0
        %558 = vmatpush1.msra.mxu0 0.0
        %559 = vmatprep.subr.mxu0 0.0
        %560 = vmatpush1.msra.mxu0 0.0
        %561 = vmatprep.subr.mxu0 0.0
        %562 = vmatpush1.msra.mxu0 0.0
        %563 = vmatprep.subr.mxu0 0.0
        %564 = vmatpush1.msra.mxu0 0.0
        %565 = vmatprep.subr.mxu0 0.0
        %566 = vmatpush1.msra.mxu0 0.0
        %567 = vmatprep.subr.mxu0 0.0
        %568 = vmatpush1.msra.mxu0 0.0
        %569 = vmatprep.subr.mxu0 0.0
        %570 = vmatpush1.msra.mxu0 0.0
        %571 = vmatprep.subr.mxu0 0.0
        %572 = vmatpush1.msra.mxu0 0.0
        %573 = vmatprep.mubr.f32.mxu0 0.0
        %574 = vmatmul.mubr.f32.gmra.mrb[0].mxu0 %v432
        %v575 = vpop.f32.mrb[0].mxu0
        %v576 = vadd.f32 0.0, %v575
        %v577 = vpop.f32.mrb[0].mxu0
        %578 = vdwg.mxu0
        %v579 = vld [vmem:[%s3] sm:$0xff]
        %v580 = vld [vmem:[%s3 + $0x8] sm:$0xff]
        %v581 = vld [vmem:[%s3 + $0x10] sm:$0xff]
        %v582 = vld [vmem:[%s3 + $0x18] sm:$0xff]
        %583 = vmatprep.subr.mxu0 0.0
        %584 = vmatpush1.msra.mxu0 %v579
        %585 = vmatprep.subr.mxu0 0.0
        %586 = vmatpush1.msra.mxu0 %v580
        %587 = vmatprep.subr.mxu0 0.0
        %588 = vmatpush1.msra.mxu0 %v581
        %589 = vmatprep.subr.mxu0 0.0
        %590 = vmatpush1.msra.mxu0 %v582
        %591 = vmatprep.subr.mxu0 0.0
        %592 = vmatpush1.msra.mxu0 0.0
        %593 = vmatprep.subr.mxu0 0.0
        %594 = vmatpush1.msra.mxu0 0.0
        %595 = vmatprep.subr.mxu0 0.0
        %596 = vmatpush1.msra.mxu0 0.0
        %597 = vmatprep.subr.mxu0 0.0
        %598 = vmatpush1.msra.mxu0 0.0
        %599 = vmatprep.subr.mxu0 0.0
        %600 = vmatpush1.msra.mxu0 0.0
        %601 = vmatprep.subr.mxu0 0.0
        %602 = vmatpush1.msra.mxu0 0.0
        %603 = vmatprep.subr.mxu0 0.0
        %604 = vmatpush1.msra.mxu0 0.0
        %605 = vmatprep.subr.mxu0 0.0
        %606 = vmatpush1.msra.mxu0 0.0
        %607 = vmatprep.subr.mxu0 0.0
        %608 = vmatpush1.msra.mxu0 0.0
        %609 = vmatprep.subr.mxu0 0.0
        %610 = vmatpush1.msra.mxu0 0.0
        %611 = vmatprep.subr.mxu0 0.0
        %612 = vmatpush1.msra.mxu0 0.0
        %613 = vmatprep.subr.mxu0 0.0
        %614 = vmatpush1.msra.mxu0 0.0
        %615 = vmatprep.subr.mxu0 0.0
        %616 = vmatpush1.msra.mxu0 0.0
        %617 = vmatprep.subr.mxu0 0.0
        %618 = vmatpush1.msra.mxu0 0.0
        %619 = vmatprep.subr.mxu0 0.0
        %620 = vmatpush1.msra.mxu0 0.0
        %621 = vmatprep.subr.mxu0 0.0
        %622 = vmatpush1.msra.mxu0 0.0
        %623 = vmatprep.subr.mxu0 0.0
        %624 = vmatpush1.msra.mxu0 0.0
        %625 = vmatprep.subr.mxu0 0.0
        %626 = vmatpush1.msra.mxu0 0.0
        %627 = vmatprep.subr.mxu0 0.0
        %628 = vmatpush1.msra.mxu0 0.0
        %629 = vmatprep.subr.mxu0 0.0
        %630 = vmatpush1.msra.mxu0 0.0
        %631 = vmatprep.subr.mxu0 0.0
        %632 = vmatpush1.msra.mxu0 0.0
        %633 = vmatprep.subr.mxu0 0.0
        %634 = vmatpush1.msra.mxu0 0.0
        %635 = vmatprep.subr.mxu0 0.0
        %636 = vmatpush1.msra.mxu0 0.0
        %637 = vmatprep.subr.mxu0 0.0
        %638 = vmatpush1.msra.mxu0 0.0
        %639 = vmatprep.subr.mxu0 0.0
        %640 = vmatpush1.msra.mxu0 0.0
        %641 = vmatprep.subr.mxu0 0.0
        %642 = vmatpush1.msra.mxu0 0.0
        %643 = vmatprep.subr.mxu0 0.0
        %644 = vmatpush1.msra.mxu0 0.0
        %645 = vmatprep.subr.mxu0 0.0
        %646 = vmatpush1.msra.mxu0 0.0
        %647 = vmatprep.mubr.f32.mxu0 0.0
        %648 = vmatmul.mubr.f32.gmra.mrb[0].mxu0 %v432
        %v649 = vpop.f32.mrb[0].mxu0
        %v650 = vadd.f32 0.0, %v649
        %v651 = vpop.f32.mrb[0].mxu0
        %652 = vdwg.mxu0
        %v653 = vld [vmem:[%s5] sm:$0xff]
        %v654 = vld [vmem:[%s6] sm:$0xff]
        %v655 = vld [vmem:[%s419] sm:$0xff]
        %v656 = vld [vmem:[%s415] sm:$0xf]
        %v657 = vld [vmem:[%s415 + $0x4] sm:$0xf]
        %v658 = vld [vmem:[%s415 + $0x8] sm:$0xf]
        %v659 = vld [vmem:[%s415 + $0xc] sm:$0xf]
        %v660 = vld [vmem:[%s4] sm:$0xff]
        %v661 = vld [vmem:[%s4 + $0x8] sm:$0xff]
        %v662 = vld [vmem:[%s4 + $0x10] sm:$0xff]
        %v663 = vld [vmem:[%s4 + $0x18] sm:$0xff]
        %v664 = vmul.f32 %v576, %v653
        %666 = vrot.lane.b32.xlu0 %v654, 4
        %v667 = vpop.permute.xlu0 %666
        %v669 = vmul.f32 %v576, %v667
        %671 = vrot.lane.b32.xlu0 %v669, 124
        %v672 = vpop.permute.xlu0 %671
        %v674 = vsub.f32 %v664, %v672
        %676 = vrot.lane.b32.xlu0 %v653, 4
        %v677 = vpop.permute.xlu0 %676
        %v679 = vmul.f32 %v576, %v677
        %v680 = vmul.f32 %v576, %v654
        %682 = vrot.lane.b32.xlu0 %v680, 4
        %v683 = vpop.permute.xlu0 %682
        %v685 = vadd.f32 %v679, %v683
        %vm686 = vcmask 31744
        %v687 = vsel %vm686, %v674, %v685
        %v689 = vrot.slane %v687, 4
        %vm691 = vcmask 1043456
        %v692 = vsel %vm691, %v656, %v689
        %v694 = vrot.slane %v650, 4
        %v696 = vsel %vm691, %v658, %v694
        %vm697 = vcmask 64512
        %698 = vst.msk [vmem:[%s424] sm:$0xff] %vm697, %v692
        %vm699 = vcmask 60416
        %700 = vst.msk [vmem:[%s424 + $0x8] sm:$0xf] %vm699, %v689
        %s701 = scalar_lea.vmem %s424, 32
        %702 = vst.msk [vmem:[%s701] sm:$0xff] %vm697, %v696
        %703 = vst.msk [vmem:[%s701 + $0x8] sm:$0xf] %vm699, %v694
        %705 = vrot.lane.b32.xlu0 %v504, 120
        %v706 = vpop.permute.xlu0 %705
        %v708 = vmul.f32 %v504, %v653
        %v709 = vmul.f32 %v706, %v653
        %v710 = vmul.f32 %v504, %v667
        %v711 = vmul.f32 %v706, %v667
        %714 = vrot.lane.b32.xlu0 %v710, 124
        %v715 = vpop.permute.xlu0 %714
        %716 = vrot.lane.b32.xlu0 %v711, 124
        %v717 = vpop.permute.xlu0 %716
        %v720 = vsub.f32 %v708, %v715
        %v721 = vsub.f32 %v709, %v717
        %v722 = vmul.f32 %v504, %v677
        %v723 = vmul.f32 %v706, %v677
        %v724 = vmul.f32 %v504, %v654
        %v725 = vmul.f32 %v706, %v654
        %728 = vrot.lane.b32.xlu0 %v724, 4
        %v729 = vpop.permute.xlu0 %728
        %730 = vrot.lane.b32.xlu0 %v725, 4
        %v731 = vpop.permute.xlu0 %730
        %v734 = vadd.f32 %v722, %v729
        %v735 = vadd.f32 %v723, %v731
        %v736 = vsel %vm686, %v720, %v734
        %v737 = vsel %vm686, %v721, %v735
        %v739 = vsel %vm697, %v736, 0
        %v742 = vsel %vm697, %v737, 0
        %v745 = vsel %vm697, %v692, 0
        %v747 = vsel %vm697, %v689, 0
        %749 = vmatprep.subr.mxu0 0.0
        %750 = vmatpush1.xpose.msra.mxu0 %v745
        %751 = vmatprep.subr.mxu0 0.0
        %752 = vmatpush1.xpose.msra.mxu0 %v747
        %753 = vmatprep.subr.mxu0 0.0
        %754 = vmatpush1.xpose.msra.mxu0 0.0
        %755 = vmatprep.subr.mxu0 0.0
        %756 = vmatpush1.xpose.msra.mxu0 0.0
        %757 = vmatprep.subr.mxu0 0.0
        %758 = vmatpush1.xpose.msra.mxu0 0.0
        %759 = vmatprep.subr.mxu0 0.0
        %760 = vmatpush1.xpose.msra.mxu0 0.0
        %761 = vmatprep.subr.mxu0 0.0
        %762 = vmatpush1.xpose.msra.mxu0 0.0
        %763 = vmatprep.subr.mxu0 0.0
        %764 = vmatpush1.xpose.msra.mxu0 0.0
        %765 = vmatprep.subr.mxu0 0.0
        %766 = vmatpush1.xpose.msra.mxu0 0.0
        %767 = vmatprep.subr.mxu0 0.0
        %768 = vmatpush1.xpose.msra.mxu0 0.0
        %769 = vmatprep.subr.mxu0 0.0
        %770 = vmatpush1.xpose.msra.mxu0 0.0
        %771 = vmatprep.subr.mxu0 0.0
        %772 = vmatpush1.xpose.msra.mxu0 0.0
        %773 = vmatprep.subr.mxu0 0.0
        %774 = vmatpush1.xpose.msra.mxu0 0.0
        %775 = vmatprep.subr.mxu0 0.0
        %776 = vmatpush1.xpose.msra.mxu0 0.0
        %777 = vmatprep.subr.mxu0 0.0
        %778 = vmatpush1.xpose.msra.mxu0 0.0
        %779 = vmatprep.subr.mxu0 0.0
        %780 = vmatpush1.xpose.msra.mxu0 0.0
        %781 = vmatprep.subr.mxu0 0.0
        %782 = vmatpush1.xpose.msra.mxu0 0.0
        %783 = vmatprep.subr.mxu0 0.0
        %784 = vmatpush1.xpose.msra.mxu0 0.0
        %785 = vmatprep.subr.mxu0 0.0
        %786 = vmatpush1.xpose.msra.mxu0 0.0
        %787 = vmatprep.subr.mxu0 0.0
        %788 = vmatpush1.xpose.msra.mxu0 0.0
        %789 = vmatprep.subr.mxu0 0.0
        %790 = vmatpush1.xpose.msra.mxu0 0.0
        %791 = vmatprep.subr.mxu0 0.0
        %792 = vmatpush1.xpose.msra.mxu0 0.0
        %793 = vmatprep.subr.mxu0 0.0
        %794 = vmatpush1.xpose.msra.mxu0 0.0
        %795 = vmatprep.subr.mxu0 0.0
        %796 = vmatpush1.xpose.msra.mxu0 0.0
        %797 = vmatprep.subr.mxu0 0.0
        %798 = vmatpush1.xpose.msra.mxu0 0.0
        %799 = vmatprep.subr.mxu0 0.0
        %800 = vmatpush1.xpose.msra.mxu0 0.0
        %801 = vmatprep.subr.mxu0 0.0
        %802 = vmatpush1.xpose.msra.mxu0 0.0
        %803 = vmatprep.subr.mxu0 0.0
        %804 = vmatpush1.xpose.msra.mxu0 0.0
        %805 = vmatprep.subr.mxu0 0.0
        %806 = vmatpush1.xpose.msra.mxu0 0.0
        %807 = vmatprep.subr.mxu0 0.0
        %808 = vmatpush1.xpose.msra.mxu0 0.0
        %809 = vmatprep.subr.mxu0 0.0
        %810 = vmatpush1.xpose.msra.mxu0 0.0
        %811 = vmatprep.subr.mxu0 0.0
        %812 = vmatpush1.xpose.msra.mxu0 0.0
        %813 = vmatprep.mubr.f32.mxu0 0.0
        %814 = vmatmul.mubr.f32.gmra.mrb[0].mxu0 %v739
        %v815 = vpop.f32.mrb[0].mxu0
        %v816 = vadd.f32 %v655, %v815
        %v817 = vpop.f32.mrb[0].mxu0
        %818 = vmatprep.mubr.f32.mxu0 0.0
        %819 = vmatmul.mubr.f32.gmra.mrb[0].mxu0 %v742
        %v820 = vpop.f32.mrb[0].mxu0
        %v821 = vadd.f32 %v655, %v820
        %v822 = vpop.f32.mrb[0].mxu0
        %823 = vdwg.mxu0
        %vm824 = vcmask 97280
        %v825 = vsel %vm824, %v816, -inf
        %826 = vmax.xlane.f32.xlu0 %v825
        %v827 = vpop.xlane.xlu0 %826
        %v828 = vsel %vm824, %v821, -inf
        %829 = vmax.xlane.f32.xlu0 %v828
        %v830 = vpop.xlane.xlu0 %829
        %v831 = vsub.f32 %v816, %v827
        %v832 = vsub.f32 %v821, %v830
        %v833 = vmul.f32 %v831, 1.442695
        %v834 = vpow.pop %v833
        %v835 = vmul.f32 %v832, 1.442695
        %v836 = vpow.pop %v835
        %v837 = vsel %vm824, %v834, 0.0
        %838 = vadd.xlane.f32.xlu0 %v837
        %v839 = vpop.xlane.xlu0 %838
        %v840 = vsel %vm824, %v836, 0.0
        %841 = vadd.xlane.f32.xlu0 %v840
        %v842 = vpop.xlane.xlu0 %841
        %v843 = vrcp.pop %v839
        %v844 = vrcp.pop %v842
        %v845 = vmul.f32 %v834, %v843
        %v846 = vmul.f32 %v836, %v844
        %v848 = vsel %vm824, %v845, 0
        %v851 = vsel %vm824, %v846, 0
        %v853 = vsel %vm691, %v694, 0
        %855 = vmatprep.subr.mxu0 0.0
        %856 = vmatpush1.msra.mxu0 %v696
        %857 = vmatprep.subr.mxu0 0.0
        %858 = vmatpush1.msra.mxu0 %v853
        %859 = vmatprep.subr.mxu0 0.0
        %860 = vmatpush1.msra.mxu0 0.0
        %861 = vmatprep.subr.mxu0 0.0
        %862 = vmatpush1.msra.mxu0 0.0
        %863 = vmatprep.subr.mxu0 0.0
        %864 = vmatpush1.msra.mxu0 0.0
        %865 = vmatprep.subr.mxu0 0.0
        %866 = vmatpush1.msra.mxu0 0.0
        %867 = vmatprep.subr.mxu0 0.0
        %868 = vmatpush1.msra.mxu0 0.0
        %869 = vmatprep.subr.mxu0 0.0
        %870 = vmatpush1.msra.mxu0 0.0
        %871 = vmatprep.subr.mxu0 0.0
        %872 = vmatpush1.msra.mxu0 0.0
        %873 = vmatprep.subr.mxu0 0.0
        %874 = vmatpush1.msra.mxu0 0.0
        %875 = vmatprep.subr.mxu0 0.0
        %876 = vmatpush1.msra.mxu0 0.0
        %877 = vmatprep.subr.mxu0 0.0
        %878 = vmatpush1.msra.mxu0 0.0
        %879 = vmatprep.subr.mxu0 0.0
        %880 = vmatpush1.msra.mxu0 0.0
        %881 = vmatprep.subr.mxu0 0.0
        %882 = vmatpush1.msra.mxu0 0.0
        %883 = vmatprep.subr.mxu0 0.0
        %884 = vmatpush1.msra.mxu0 0.0
        %885 = vmatprep.subr.mxu0 0.0
        %886 = vmatpush1.msra.mxu0 0.0
        %887 = vmatprep.subr.mxu0 0.0
        %888 = vmatpush1.msra.mxu0 0.0
        %889 = vmatprep.subr.mxu0 0.0
        %890 = vmatpush1.msra.mxu0 0.0
        %891 = vmatprep.subr.mxu0 0.0
        %892 = vmatpush1.msra.mxu0 0.0
        %893 = vmatprep.subr.mxu0 0.0
        %894 = vmatpush1.msra.mxu0 0.0
        %895 = vmatprep.subr.mxu0 0.0
        %896 = vmatpush1.msra.mxu0 0.0
        %897 = vmatprep.subr.mxu0 0.0
        %898 = vmatpush1.msra.mxu0 0.0
        %899 = vmatprep.subr.mxu0 0.0
        %900 = vmatpush1.msra.mxu0 0.0
        %901 = vmatprep.subr.mxu0 0.0
        %902 = vmatpush1.msra.mxu0 0.0
        %903 = vmatprep.subr.mxu0 0.0
        %904 = vmatpush1.msra.mxu0 0.0
        %905 = vmatprep.subr.mxu0 0.0
        %906 = vmatpush1.msra.mxu0 0.0
        %907 = vmatprep.subr.mxu0 0.0
        %908 = vmatpush1.msra.mxu0 0.0
        %909 = vmatprep.subr.mxu0 0.0
        %910 = vmatpush1.msra.mxu0 0.0
        %911 = vmatprep.subr.mxu0 0.0
        %912 = vmatpush1.msra.mxu0 0.0
        %913 = vmatprep.subr.mxu0 0.0
        %914 = vmatpush1.msra.mxu0 0.0
        %915 = vmatprep.subr.mxu0 0.0
        %916 = vmatpush1.msra.mxu0 0.0
        %917 = vmatprep.subr.mxu0 0.0
        %918 = vmatpush1.msra.mxu0 0.0
        %919 = vmatprep.mubr.f32.mxu0 0.0
        %920 = vmatmul.mubr.f32.gmra.mrb[0].mxu0 %v848
        %v921 = vpop.f32.mrb[0].mxu0
        %v922 = vadd.f32 0.0, %v921
        %v923 = vpop.f32.mrb[0].mxu0
        %924 = vmatprep.mubr.f32.mxu0 0.0
        %925 = vmatmul.mubr.f32.gmra.mrb[0].mxu0 %v851
        %v926 = vpop.f32.mrb[0].mxu0
        %v927 = vadd.f32 0.0, %v926
        %v928 = vpop.f32.mrb[0].mxu0
        %929 = vdwg.mxu0
        %v931 = vsel %vm697, %v927, 0
        %933 = vmatprep.subr.mxu0 0.0
        %934 = vmatpush1.msra.mxu0 %v661
        %935 = vmatprep.subr.mxu0 0.0
        %936 = vmatpush1.msra.mxu0 0.0
        %937 = vmatprep.subr.mxu0 0.0
        %938 = vmatpush1.msra.mxu0 0.0
        %939 = vmatprep.subr.mxu0 0.0
        %940 = vmatpush1.msra.mxu0 0.0
        %941 = vmatprep.subr.mxu0 0.0
        %942 = vmatpush1.msra.mxu0 0.0
        %943 = vmatprep.subr.mxu0 0.0
        %944 = vmatpush1.msra.mxu0 0.0
        %945 = vmatprep.subr.mxu0 0.0
        %946 = vmatpush1.msra.mxu0 0.0
        %947 = vmatprep.subr.mxu0 0.0
        %948 = vmatpush1.msra.mxu0 0.0
        %949 = vmatprep.subr.mxu0 0.0
        %950 = vmatpush1.msra.mxu0 0.0
        %951 = vmatprep.subr.mxu0 0.0
        %952 = vmatpush1.msra.mxu0 0.0
        %953 = vmatprep.subr.mxu0 0.0
        %954 = vmatpush1.msra.mxu0 0.0
        %955 = vmatprep.subr.mxu0 0.0
        %956 = vmatpush1.msra.mxu0 0.0
        %957 = vmatprep.subr.mxu0 0.0
        %958 = vmatpush1.msra.mxu0 0.0
        %959 = vmatprep.subr.mxu0 0.0
        %960 = vmatpush1.msra.mxu0 0.0
        %961 = vmatprep.subr.mxu0 0.0
        %962 = vmatpush1.msra.mxu0 0.0
        %963 = vmatprep.subr.mxu0 0.0
        %964 = vmatpush1.msra.mxu0 0.0
        %965 = vmatprep.subr.mxu0 0.0
        %966 = vmatpush1.msra.mxu0 0.0
        %967 = vmatprep.subr.mxu0 0.0
        %968 = vmatpush1.msra.mxu0 0.0
        %969 = vmatprep.subr.mxu0 0.0
        %970 = vmatpush1.msra.mxu0 0.0
        %971 = vmatprep.subr.mxu0 0.0
        %972 = vmatpush1.msra.mxu0 0.0
        %973 = vmatprep.subr.mxu0 0.0
        %974 = vmatpush1.msra.mxu0 0.0
        %975 = vmatprep.subr.mxu0 0.0
        %976 = vmatpush1.msra.mxu0 0.0
        %977 = vmatprep.subr.mxu0 0.0
        %978 = vmatpush1.msra.mxu0 0.0
        %979 = vmatprep.subr.mxu0 0.0
        %980 = vmatpush1.msra.mxu0 0.0
        %981 = vmatprep.subr.mxu0 0.0
        %982 = vmatpush1.msra.mxu0 0.0
        %983 = vmatprep.subr.mxu0 0.0
        %984 = vmatpush1.msra.mxu0 0.0
        %985 = vmatprep.subr.mxu0 0.0
        %986 = vmatpush1.msra.mxu0 0.0
        %987 = vmatprep.subr.mxu0 0.0
        %988 = vmatpush1.msra.mxu0 0.0
        %989 = vmatprep.subr.mxu0 0.0
        %990 = vmatpush1.msra.mxu0 0.0
        %991 = vmatprep.subr.mxu0 0.0
        %992 = vmatpush1.msra.mxu0 0.0
        %993 = vmatprep.subr.mxu0 0.0
        %994 = vmatpush1.msra.mxu0 0.0
        %995 = vmatprep.subr.mxu0 0.0
        %996 = vmatpush1.msra.mxu0 0.0
        %997 = vmatprep.mubr.f32.mxu0 0.0
        %998 = vmatmul.mubr.f32.gmra.mrb[0].mxu0 %v931
        %v999 = vpop.f32.mrb[0].mxu0
        %v1000 = vadd.f32 0.0, %v999
        %v1001 = vpop.f32.mrb[0].mxu0
        %1002 = vdwg.mxu0
        %v1004 = vsel %vm697, %v922, 0
        %1006 = vmatprep.subr.mxu0 0.0
        %1007 = vmatpush1.msra.mxu0 %v660
        %1008 = vmatprep.subr.mxu0 0.0
        %1009 = vmatpush1.msra.mxu0 0.0
        %1010 = vmatprep.subr.mxu0 0.0
        %1011 = vmatpush1.msra.mxu0 0.0
        %1012 = vmatprep.subr.mxu0 0.0
        %1013 = vmatpush1.msra.mxu0 0.0
        %1014 = vmatprep.subr.mxu0 0.0
        %1015 = vmatpush1.msra.mxu0 0.0
        %1016 = vmatprep.subr.mxu0 0.0
        %1017 = vmatpush1.msra.mxu0 0.0
        %1018 = vmatprep.subr.mxu0 0.0
        %1019 = vmatpush1.msra.mxu0 0.0
        %1020 = vmatprep.subr.mxu0 0.0
        %1021 = vmatpush1.msra.mxu0 0.0
        %1022 = vmatprep.subr.mxu0 0.0
        %1023 = vmatpush1.msra.mxu0 0.0
        %1024 = vmatprep.subr.mxu0 0.0
        %1025 = vmatpush1.msra.mxu0 0.0
        %1026 = vmatprep.subr.mxu0 0.0
        %1027 = vmatpush1.msra.mxu0 0.0
        %1028 = vmatprep.subr.mxu0 0.0
        %1029 = vmatpush1.msra.mxu0 0.0
        %1030 = vmatprep.subr.mxu0 0.0
        %1031 = vmatpush1.msra.mxu0 0.0
        %1032 = vmatprep.subr.mxu0 0.0
        %1033 = vmatpush1.msra.mxu0 0.0
        %1034 = vmatprep.subr.mxu0 0.0
        %1035 = vmatpush1.msra.mxu0 0.0
        %1036 = vmatprep.subr.mxu0 0.0
        %1037 = vmatpush1.msra.mxu0 0.0
        %1038 = vmatprep.subr.mxu0 0.0
        %1039 = vmatpush1.msra.mxu0 0.0
        %1040 = vmatprep.subr.mxu0 0.0
        %1041 = vmatpush1.msra.mxu0 0.0
        %1042 = vmatprep.subr.mxu0 0.0
        %1043 = vmatpush1.msra.mxu0 0.0
        %1044 = vmatprep.subr.mxu0 0.0
        %1045 = vmatpush1.msra.mxu0 0.0
        %1046 = vmatprep.subr.mxu0 0.0
        %1047 = vmatpush1.msra.mxu0 0.0
        %1048 = vmatprep.subr.mxu0 0.0
        %1049 = vmatpush1.msra.mxu0 0.0
        %1050 = vmatprep.subr.mxu0 0.0
        %1051 = vmatpush1.msra.mxu0 0.0
        %1052 = vmatprep.subr.mxu0 0.0
        %1053 = vmatpush1.msra.mxu0 0.0
        %1054 = vmatprep.subr.mxu0 0.0
        %1055 = vmatpush1.msra.mxu0 0.0
        %1056 = vmatprep.subr.mxu0 0.0
        %1057 = vmatpush1.msra.mxu0 0.0
        %1058 = vmatprep.subr.mxu0 0.0
        %1059 = vmatpush1.msra.mxu0 0.0
        %1060 = vmatprep.subr.mxu0 0.0
        %1061 = vmatpush1.msra.mxu0 0.0
        %1062 = vmatprep.subr.mxu0 0.0
        %1063 = vmatpush1.msra.mxu0 0.0
        %1064 = vmatprep.subr.mxu0 0.0
        %1065 = vmatpush1.msra.mxu0 0.0
        %1066 = vmatprep.subr.mxu0 0.0
        %1067 = vmatpush1.msra.mxu0 0.0
        %1068 = vmatprep.subr.mxu0 0.0
        %1069 = vmatpush1.msra.mxu0 0.0
        %1070 = vmatprep.mubr.f32.mxu0 0.0
        %1071 = vmatmul.mubr.f32.gmra.mrb[0].mxu0 %v1004
        %v1072 = vpop.f32.mrb[0].mxu0
        %v1073 = vadd.f32 %v1000, %v1072
        %v1074 = vpop.f32.mrb[0].mxu0
        %1075 = vdwg.mxu0
        %1076 = vrot.lane.b32.xlu0 %v653, 8
        %v1077 = vpop.permute.xlu0 %1076
        %v1079 = vmul.f32 %v576, %v1077
        %1080 = vrot.lane.b32.xlu0 %v654, 12
        %v1081 = vpop.permute.xlu0 %1080
        %v1083 = vmul.f32 %v576, %v1081
        %1085 = vrot.lane.b32.xlu0 %v1083, 124
        %v1086 = vpop.permute.xlu0 %1085
        %v1088 = vsub.f32 %v1079, %v1086
        %1089 = vrot.lane.b32.xlu0 %v653, 12
        %v1090 = vpop.permute.xlu0 %1089
        %v1092 = vmul.f32 %v576, %v1090
        %1093 = vrot.lane.b32.xlu0 %v654, 8
        %v1094 = vpop.permute.xlu0 %1093
        %v1096 = vmul.f32 %v576, %v1094
        %1098 = vrot.lane.b32.xlu0 %v1096, 4
        %v1099 = vpop.permute.xlu0 %1098
        %v1101 = vadd.f32 %v1092, %v1099
        %1103 = vrot.lane.b32.xlu0 %v1088, 120
        %v1104 = vpop.permute.xlu0 %1103
        %1107 = vrot.lane.b32.xlu0 %v1101, 120
        %v1108 = vpop.permute.xlu0 %1107
        %v1110 = vsel %vm686, %v1104, %v1108
        %v1112 = vrot.slane %v1110, 4
        %v1114 = vsel %vm691, %v657, %v1112
        %1115 = vrot.lane.b32.xlu0 %v694, 120
        %v1116 = vpop.permute.xlu0 %1115
        %v1118 = vsel %vm691, %v659, %v1116
        %s1119 = scalar_lea.vmem %s424, 16
        %1120 = vst.msk [vmem:[%s1119] sm:$0xff] %vm697, %v1114
        %1121 = vst.msk [vmem:[%s1119 + $0x8] sm:$0xf] %vm699, %v1112
        %s1122 = scalar_lea.vmem %s424, 48
        %1123 = vst.msk [vmem:[%s1122] sm:$0xff] %vm697, %v1118
        %1124 = vst.msk [vmem:[%s1122 + $0x8] sm:$0xf] %vm699, %v1116
        %1125 = vrot.lane.b32.xlu0 %v653, 16
        %v1126 = vpop.permute.xlu0 %1125
        %v1128 = vmul.f32 %v504, %v1126
        %v1129 = vmul.f32 %v706, %v1126
        %1130 = vrot.lane.b32.xlu0 %v654, 20
        %v1131 = vpop.permute.xlu0 %1130
        %v1133 = vmul.f32 %v504, %v1131
        %v1134 = vmul.f32 %v706, %v1131
        %1137 = vrot.lane.b32.xlu0 %v1133, 124
        %v1138 = vpop.permute.xlu0 %1137
        %1139 = vrot.lane.b32.xlu0 %v1134, 124
        %v1140 = vpop.permute.xlu0 %1139
        %v1143 = vsub.f32 %v1128, %v1138
        %v1144 = vsub.f32 %v1129, %v1140
        %1145 = vrot.lane.b32.xlu0 %v653, 20
        %v1146 = vpop.permute.xlu0 %1145
        %v1148 = vmul.f32 %v504, %v1146
        %v1149 = vmul.f32 %v706, %v1146
        %1150 = vrot.lane.b32.xlu0 %v654, 16
        %v1151 = vpop.permute.xlu0 %1150
        %v1153 = vmul.f32 %v504, %v1151
        %v1154 = vmul.f32 %v706, %v1151
        %1157 = vrot.lane.b32.xlu0 %v1153, 4
        %v1158 = vpop.permute.xlu0 %1157
        %1159 = vrot.lane.b32.xlu0 %v1154, 4
        %v1160 = vpop.permute.xlu0 %1159
        %v1163 = vadd.f32 %v1148, %v1158
        %v1164 = vadd.f32 %v1149, %v1160
        %1167 = vrot.lane.b32.xlu0 %v1143, 112
        %v1168 = vpop.permute.xlu0 %1167
        %1169 = vrot.lane.b32.xlu0 %v1144, 112
        %v1170 = vpop.permute.xlu0 %1169
        %1175 = vrot.lane.b32.xlu0 %v1163, 112
        %v1176 = vpop.permute.xlu0 %1175
        %1177 = vrot.lane.b32.xlu0 %v1164, 112
        %v1178 = vpop.permute.xlu0 %1177
        %v1181 = vsel %vm686, %v1168, %v1176
        %v1182 = vsel %vm686, %v1170, %v1178
        %v1184 = vsel %vm697, %v1181, 0
        %v1187 = vsel %vm697, %v1182, 0
        %v1190 = vsel %vm697, %v1114, 0
        %v1192 = vsel %vm697, %v1112, 0
        %1194 = vmatprep.subr.mxu0 0.0
        %1195 = vmatpush1.xpose.msra.mxu0 %v1190
        %1196 = vmatprep.subr.mxu0 0.0
        %1197 = vmatpush1.xpose.msra.mxu0 %v1192
        %1198 = vmatprep.subr.mxu0 0.0
        %1199 = vmatpush1.xpose.msra.mxu0 0.0
        %1200 = vmatprep.subr.mxu0 0.0
        %1201 = vmatpush1.xpose.msra.mxu0 0.0
        %1202 = vmatprep.subr.mxu0 0.0
        %1203 = vmatpush1.xpose.msra.mxu0 0.0
        %1204 = vmatprep.subr.mxu0 0.0
        %1205 = vmatpush1.xpose.msra.mxu0 0.0
        %1206 = vmatprep.subr.mxu0 0.0
        %1207 = vmatpush1.xpose.msra.mxu0 0.0
        %1208 = vmatprep.subr.mxu0 0.0
        %1209 = vmatpush1.xpose.msra.mxu0 0.0
        %1210 = vmatprep.subr.mxu0 0.0
        %1211 = vmatpush1.xpose.msra.mxu0 0.0
        %1212 = vmatprep.subr.mxu0 0.0
        %1213 = vmatpush1.xpose.msra.mxu0 0.0
        %1214 = vmatprep.subr.mxu0 0.0
        %1215 = vmatpush1.xpose.msra.mxu0 0.0
        %1216 = vmatprep.subr.mxu0 0.0
        %1217 = vmatpush1.xpose.msra.mxu0 0.0
        %1218 = vmatprep.subr.mxu0 0.0
        %1219 = vmatpush1.xpose.msra.mxu0 0.0
        %1220 = vmatprep.subr.mxu0 0.0
        %1221 = vmatpush1.xpose.msra.mxu0 0.0
        %1222 = vmatprep.subr.mxu0 0.0
        %1223 = vmatpush1.xpose.msra.mxu0 0.0
        %1224 = vmatprep.subr.mxu0 0.0
        %1225 = vmatpush1.xpose.msra.mxu0 0.0
        %1226 = vmatprep.subr.mxu0 0.0
        %1227 = vmatpush1.xpose.msra.mxu0 0.0
        %1228 = vmatprep.subr.mxu0 0.0
        %1229 = vmatpush1.xpose.msra.mxu0 0.0
        %1230 = vmatprep.subr.mxu0 0.0
        %1231 = vmatpush1.xpose.msra.mxu0 0.0
        %1232 = vmatprep.subr.mxu0 0.0
        %1233 = vmatpush1.xpose.msra.mxu0 0.0
        %1234 = vmatprep.subr.mxu0 0.0
        %1235 = vmatpush1.xpose.msra.mxu0 0.0
        %1236 = vmatprep.subr.mxu0 0.0
        %1237 = vmatpush1.xpose.msra.mxu0 0.0
        %1238 = vmatprep.subr.mxu0 0.0
        %1239 = vmatpush1.xpose.msra.mxu0 0.0
        %1240 = vmatprep.subr.mxu0 0.0
        %1241 = vmatpush1.xpose.msra.mxu0 0.0
        %1242 = vmatprep.subr.mxu0 0.0
        %1243 = vmatpush1.xpose.msra.mxu0 0.0
        %1244 = vmatprep.subr.mxu0 0.0
        %1245 = vmatpush1.xpose.msra.mxu0 0.0
        %1246 = vmatprep.subr.mxu0 0.0
        %1247 = vmatpush1.xpose.msra.mxu0 0.0
        %1248 = vmatprep.subr.mxu0 0.0
        %1249 = vmatpush1.xpose.msra.mxu0 0.0
        %1250 = vmatprep.subr.mxu0 0.0
        %1251 = vmatpush1.xpose.msra.mxu0 0.0
        %1252 = vmatprep.subr.mxu0 0.0
        %1253 = vmatpush1.xpose.msra.mxu0 0.0
        %1254 = vmatprep.subr.mxu0 0.0
        %1255 = vmatpush1.xpose.msra.mxu0 0.0
        %1256 = vmatprep.subr.mxu0 0.0
        %1257 = vmatpush1.xpose.msra.mxu0 0.0
        %1258 = vmatprep.mubr.f32.mxu0 0.0
        %1259 = vmatmul.mubr.f32.gmra.mrb[0].mxu0 %v1184
        %v1260 = vpop.f32.mrb[0].mxu0
        %v1261 = vadd.f32 %v655, %v1260
        %v1262 = vpop.f32.mrb[0].mxu0
        %1263 = vmatprep.mubr.f32.mxu0 0.0
        %1264 = vmatmul.mubr.f32.gmra.mrb[0].mxu0 %v1187
        %v1265 = vpop.f32.mrb[0].mxu0
        %v1266 = vadd.f32 %v655, %v1265
        %v1267 = vpop.f32.mrb[0].mxu0
        %1268 = vdwg.mxu0
        %v1269 = vsel %vm824, %v1261, -inf
        %1270 = vmax.xlane.f32.xlu0 %v1269
        %v1271 = vpop.xlane.xlu0 %1270
        %v1272 = vsel %vm824, %v1266, -inf
        %1273 = vmax.xlane.f32.xlu0 %v1272
        %v1274 = vpop.xlane.xlu0 %1273
        %v1275 = vsub.f32 %v1261, %v1271
        %v1276 = vsub.f32 %v1266, %v1274
        %v1277 = vmul.f32 %v1275, 1.442695
        %v1278 = vpow.pop %v1277
        %v1279 = vmul.f32 %v1276, 1.442695
        %v1280 = vpow.pop %v1279
        %v1281 = vsel %vm824, %v1278, 0.0
        %1282 = vadd.xlane.f32.xlu0 %v1281
        %v1283 = vpop.xlane.xlu0 %1282
        %v1284 = vsel %vm824, %v1280, 0.0
        %1285 = vadd.xlane.f32.xlu0 %v1284
        %v1286 = vpop.xlane.xlu0 %1285
        %v1287 = vrcp.pop %v1283
        %v1288 = vrcp.pop %v1286
        %v1289 = vmul.f32 %v1278, %v1287
        %v1290 = vmul.f32 %v1280, %v1288
        %v1292 = vsel %vm824, %v1289, 0
        %v1295 = vsel %vm824, %v1290, 0
        %v1297 = vsel %vm691, %v1116, 0
        %1299 = vmatprep.subr.mxu0 0.0
        %1300 = vmatpush1.msra.mxu0 %v1118
        %1301 = vmatprep.subr.mxu0 0.0
        %1302 = vmatpush1.msra.mxu0 %v1297
        %1303 = vmatprep.subr.mxu0 0.0
        %1304 = vmatpush1.msra.mxu0 0.0
        %1305 = vmatprep.subr.mxu0 0.0
        %1306 = vmatpush1.msra.mxu0 0.0
        %1307 = vmatprep.subr.mxu0 0.0
        %1308 = vmatpush1.msra.mxu0 0.0
        %1309 = vmatprep.subr.mxu0 0.0
        %1310 = vmatpush1.msra.mxu0 0.0
        %1311 = vmatprep.subr.mxu0 0.0
        %1312 = vmatpush1.msra.mxu0 0.0
        %1313 = vmatprep.subr.mxu0 0.0
        %1314 = vmatpush1.msra.mxu0 0.0
        %1315 = vmatprep.subr.mxu0 0.0
        %1316 = vmatpush1.msra.mxu0 0.0
        %1317 = vmatprep.subr.mxu0 0.0
        %1318 = vmatpush1.msra.mxu0 0.0
        %1319 = vmatprep.subr.mxu0 0.0
        %1320 = vmatpush1.msra.mxu0 0.0
        %1321 = vmatprep.subr.mxu0 0.0
        %1322 = vmatpush1.msra.mxu0 0.0
        %1323 = vmatprep.subr.mxu0 0.0
        %1324 = vmatpush1.msra.mxu0 0.0
        %1325 = vmatprep.subr.mxu0 0.0
        %1326 = vmatpush1.msra.mxu0 0.0
        %1327 = vmatprep.subr.mxu0 0.0
        %1328 = vmatpush1.msra.mxu0 0.0
        %1329 = vmatprep.subr.mxu0 0.0
        %1330 = vmatpush1.msra.mxu0 0.0
        %1331 = vmatprep.subr.mxu0 0.0
        %1332 = vmatpush1.msra.mxu0 0.0
        %1333 = vmatprep.subr.mxu0 0.0
        %1334 = vmatpush1.msra.mxu0 0.0
        %1335 = vmatprep.subr.mxu0 0.0
        %1336 = vmatpush1.msra.mxu0 0.0
        %1337 = vmatprep.subr.mxu0 0.0
        %1338 = vmatpush1.msra.mxu0 0.0
        %1339 = vmatprep.subr.mxu0 0.0
        %1340 = vmatpush1.msra.mxu0 0.0
        %1341 = vmatprep.subr.mxu0 0.0
        %1342 = vmatpush1.msra.mxu0 0.0
        %1343 = vmatprep.subr.mxu0 0.0
        %1344 = vmatpush1.msra.mxu0 0.0
        %1345 = vmatprep.subr.mxu0 0.0
        %1346 = vmatpush1.msra.mxu0 0.0
        %1347 = vmatprep.subr.mxu0 0.0
        %1348 = vmatpush1.msra.mxu0 0.0
        %1349 = vmatprep.subr.mxu0 0.0
        %1350 = vmatpush1.msra.mxu0 0.0
        %1351 = vmatprep.subr.mxu0 0.0
        %1352 = vmatpush1.msra.mxu0 0.0
        %1353 = vmatprep.subr.mxu0 0.0
        %1354 = vmatpush1.msra.mxu0 0.0
        %1355 = vmatprep.subr.mxu0 0.0
        %1356 = vmatpush1.msra.mxu0 0.0
        %1357 = vmatprep.subr.mxu0 0.0
        %1358 = vmatpush1.msra.mxu0 0.0
        %1359 = vmatprep.subr.mxu0 0.0
        %1360 = vmatpush1.msra.mxu0 0.0
        %1361 = vmatprep.subr.mxu0 0.0
        %1362 = vmatpush1.msra.mxu0 0.0
        %1363 = vmatprep.mubr.f32.mxu0 0.0
        %1364 = vmatmul.mubr.f32.gmra.mrb[0].mxu0 %v1292
        %v1365 = vpop.f32.mrb[0].mxu0
        %v1366 = vadd.f32 0.0, %v1365
        %v1367 = vpop.f32.mrb[0].mxu0
        %1368 = vmatprep.mubr.f32.mxu0 0.0
        %1369 = vmatmul.mubr.f32.gmra.mrb[0].mxu0 %v1295
        %v1370 = vpop.f32.mrb[0].mxu0
        %v1371 = vadd.f32 0.0, %v1370
        %v1372 = vpop.f32.mrb[0].mxu0
        %1373 = vdwg.mxu0
        %v1375 = vsel %vm697, %v1366, 0
        %1377 = vmatprep.subr.mxu0 0.0
        %1378 = vmatpush1.msra.mxu0 %v662
        %1379 = vmatprep.subr.mxu0 0.0
        %1380 = vmatpush1.msra.mxu0 0.0
        %1381 = vmatprep.subr.mxu0 0.0
        %1382 = vmatpush1.msra.mxu0 0.0
        %1383 = vmatprep.subr.mxu0 0.0
        %1384 = vmatpush1.msra.mxu0 0.0
        %1385 = vmatprep.subr.mxu0 0.0
        %1386 = vmatpush1.msra.mxu0 0.0
        %1387 = vmatprep.subr.mxu0 0.0
        %1388 = vmatpush1.msra.mxu0 0.0
        %1389 = vmatprep.subr.mxu0 0.0
        %1390 = vmatpush1.msra.mxu0 0.0
        %1391 = vmatprep.subr.mxu0 0.0
        %1392 = vmatpush1.msra.mxu0 0.0
        %1393 = vmatprep.subr.mxu0 0.0
        %1394 = vmatpush1.msra.mxu0 0.0
        %1395 = vmatprep.subr.mxu0 0.0
        %1396 = vmatpush1.msra.mxu0 0.0
        %1397 = vmatprep.subr.mxu0 0.0
        %1398 = vmatpush1.msra.mxu0 0.0
        %1399 = vmatprep.subr.mxu0 0.0
        %1400 = vmatpush1.msra.mxu0 0.0
        %1401 = vmatprep.subr.mxu0 0.0
        %1402 = vmatpush1.msra.mxu0 0.0
        %1403 = vmatprep.subr.mxu0 0.0
        %1404 = vmatpush1.msra.mxu0 0.0
        %1405 = vmatprep.subr.mxu0 0.0
        %1406 = vmatpush1.msra.mxu0 0.0
        %1407 = vmatprep.subr.mxu0 0.0
        %1408 = vmatpush1.msra.mxu0 0.0
        %1409 = vmatprep.subr.mxu0 0.0
        %1410 = vmatpush1.msra.mxu0 0.0
        %1411 = vmatprep.subr.mxu0 0.0
        %1412 = vmatpush1.msra.mxu0 0.0
        %1413 = vmatprep.subr.mxu0 0.0
        %1414 = vmatpush1.msra.mxu0 0.0
        %1415 = vmatprep.subr.mxu0 0.0
        %1416 = vmatpush1.msra.mxu0 0.0
        %1417 = vmatprep.subr.mxu0 0.0
        %1418 = vmatpush1.msra.mxu0 0.0
        %1419 = vmatprep.subr.mxu0 0.0
        %1420 = vmatpush1.msra.mxu0 0.0
        %1421 = vmatprep.subr.mxu0 0.0
        %1422 = vmatpush1.msra.mxu0 0.0
        %1423 = vmatprep.subr.mxu0 0.0
        %1424 = vmatpush1.msra.mxu0 0.0
        %1425 = vmatprep.subr.mxu0 0.0
        %1426 = vmatpush1.msra.mxu0 0.0
        %1427 = vmatprep.subr.mxu0 0.0
        %1428 = vmatpush1.msra.mxu0 0.0
        %1429 = vmatprep.subr.mxu0 0.0
        %1430 = vmatpush1.msra.mxu0 0.0
        %1431 = vmatprep.subr.mxu0 0.0
        %1432 = vmatpush1.msra.mxu0 0.0
        %1433 = vmatprep.subr.mxu0 0.0
        %1434 = vmatpush1.msra.mxu0 0.0
        %1435 = vmatprep.subr.mxu0 0.0
        %1436 = vmatpush1.msra.mxu0 0.0
        %1437 = vmatprep.subr.mxu0 0.0
        %1438 = vmatpush1.msra.mxu0 0.0
        %1439 = vmatprep.subr.mxu0 0.0
        %1440 = vmatpush1.msra.mxu0 0.0
        %1441 = vmatprep.mubr.f32.mxu0 0.0
        %1442 = vmatmul.mubr.f32.gmra.mrb[0].mxu0 %v1375
        %v1443 = vpop.f32.mrb[0].mxu0
        %v1444 = vadd.f32 0.0, %v1443
        %v1445 = vpop.f32.mrb[0].mxu0
        %1446 = vdwg.mxu0
        %v1447 = vadd.f32 %v1073, %v1444
        %v1449 = vsel %vm697, %v1371, 0
        %1451 = vmatprep.subr.mxu0 0.0
        %1452 = vmatpush1.msra.mxu0 %v663
        %1453 = vmatprep.subr.mxu0 0.0
        %1454 = vmatpush1.msra.mxu0 0.0
        %1455 = vmatprep.subr.mxu0 0.0
        %1456 = vmatpush1.msra.mxu0 0.0
        %1457 = vmatprep.subr.mxu0 0.0
        %1458 = vmatpush1.msra.mxu0 0.0
        %1459 = vmatprep.subr.mxu0 0.0
        %1460 = vmatpush1.msra.mxu0 0.0
        %1461 = vmatprep.subr.mxu0 0.0
        %1462 = vmatpush1.msra.mxu0 0.0
        %1463 = vmatprep.subr.mxu0 0.0
        %1464 = vmatpush1.msra.mxu0 0.0
        %1465 = vmatprep.subr.mxu0 0.0
        %1466 = vmatpush1.msra.mxu0 0.0
        %1467 = vmatprep.subr.mxu0 0.0
        %1468 = vmatpush1.msra.mxu0 0.0
        %1469 = vmatprep.subr.mxu0 0.0
        %1470 = vmatpush1.msra.mxu0 0.0
        %1471 = vmatprep.subr.mxu0 0.0
        %1472 = vmatpush1.msra.mxu0 0.0
        %1473 = vmatprep.subr.mxu0 0.0
        %1474 = vmatpush1.msra.mxu0 0.0
        %1475 = vmatprep.subr.mxu0 0.0
        %1476 = vmatpush1.msra.mxu0 0.0
        %1477 = vmatprep.subr.mxu0 0.0
        %1478 = vmatpush1.msra.mxu0 0.0
        %1479 = vmatprep.subr.mxu0 0.0
        %1480 = vmatpush1.msra.mxu0 0.0
        %1481 = vmatprep.subr.mxu0 0.0
        %1482 = vmatpush1.msra.mxu0 0.0
        %1483 = vmatprep.subr.mxu0 0.0
        %1484 = vmatpush1.msra.mxu0 0.0
        %1485 = vmatprep.subr.mxu0 0.0
        %1486 = vmatpush1.msra.mxu0 0.0
        %1487 = vmatprep.subr.mxu0 0.0
        %1488 = vmatpush1.msra.mxu0 0.0
        %1489 = vmatprep.subr.mxu0 0.0
        %1490 = vmatpush1.msra.mxu0 0.0
        %1491 = vmatprep.subr.mxu0 0.0
        %1492 = vmatpush1.msra.mxu0 0.0
        %1493 = vmatprep.subr.mxu0 0.0
        %1494 = vmatpush1.msra.mxu0 0.0
        %1495 = vmatprep.subr.mxu0 0.0
        %1496 = vmatpush1.msra.mxu0 0.0
        %1497 = vmatprep.subr.mxu0 0.0
        %1498 = vmatpush1.msra.mxu0 0.0
        %1499 = vmatprep.subr.mxu0 0.0
        %1500 = vmatpush1.msra.mxu0 0.0
        %1501 = vmatprep.subr.mxu0 0.0
        %1502 = vmatpush1.msra.mxu0 0.0
        %1503 = vmatprep.subr.mxu0 0.0
        %1504 = vmatpush1.msra.mxu0 0.0
        %1505 = vmatprep.subr.mxu0 0.0
        %1506 = vmatpush1.msra.mxu0 0.0
        %1507 = vmatprep.subr.mxu0 0.0
        %1508 = vmatpush1.msra.mxu0 0.0
        %1509 = vmatprep.subr.mxu0 0.0
        %1510 = vmatpush1.msra.mxu0 0.0
        %1511 = vmatprep.subr.mxu0 0.0
        %1512 = vmatpush1.msra.mxu0 0.0
        %1513 = vmatprep.subr.mxu0 0.0
        %1514 = vmatpush1.msra.mxu0 0.0
        %1515 = vmatprep.mubr.f32.mxu0 0.0
        %1516 = vmatmul.mubr.f32.gmra.mrb[0].mxu0 %v1449
        %v1517 = vpop.f32.mrb[0].mxu0
        %v1518 = vadd.f32 0.0, %v1517
        %v1519 = vpop.f32.mrb[0].mxu0
        %1520 = vdwg.mxu0
        %v1521 = vadd.f32 %v1447, %v1518
        %1522 = vst.msk [vmem:[%s403] sm:$0xff] %vm430, %v1521
        %s1523 = sand.u32 %s240, 1
        %s1524 = scalar_lea.sflag [#allocation4], %s1523
        %s1525 = sand.u32 %s240, 1
        %s1526 = smul.addr %s1525, 8
        %s1527 = scalar_lea.vmem [#allocation5], %s1526
        %p1528 = scmp.lt.s32.totalorder %s28, 1
        %s1529 = scalar_select %p1528, %s28, 1
        %s1530 = smul.addr %s1529, 8
        %s1531 = smul.addr %s1530, 8
        %s1532 = scalar_lea.vmem %s10, %s1531
        // Predicated region
        $region61: #{tpu_custom_call.1} parent=55 // pred_check
          %p1533 = pneg %p250
        $region62: #{tpu_custom_call.1} parent=55 // pred_check_branch
          %1535 = sbr.rel (%p1533) target = $region64
        $region63: #{tpu_custom_call.1} parent=55 // pred_region
          %s1537 = ssub.s32 128, 128
          %1538 = vsyncadd %s1524, %s1537
          %s1539 = smul.addr %s28, 128
          %s1540 = scalar_lea.hbm %s9, %s1539
          %s1542 = sshll.u32 %s1527, 4
          %s1543 = int_to_ptr.vmem [resolvable:$true] %s1542
          %1545 = dma.vmem_to_hbm [thread:$0]  %s1543, 128, %s1540, %s1524
        $region64: #{tpu_custom_call.1} parent=55 // pred_fallthru
          _
        // Predicated region
        $region65: #{tpu_custom_call.1} parent=55 // pred_check
          %p1546 = pneg %p276
        $region66: #{tpu_custom_call.1} parent=55 // pred_check_branch
          %1548 = sbr.rel (%p1546) target = $region68
        $region67: #{tpu_custom_call.1} parent=55 // pred_region
          _
        $region68: #{tpu_custom_call.1} parent=55 // pred_fallthru
          _
      $region56: #{tpu_custom_call.1} parent=5 // pred_fallthru
        _
      %p1549 = scmp.le.s32.totalorder 2, %s23
      // Predicated region
      $region69: #{tpu_custom_call.1} parent=5 // pred_check
        %p1550 = pneg %p1549
      $region70: #{tpu_custom_call.1} parent=5 // pred_check_branch
        %1552 = sbr.rel (%p1550) target = $region72
      $region71: #{tpu_custom_call.1} parent=5 // pred_region
        %s1553 = ssub.s32 %s23, 2
        // Predicated region
        $region73: #{tpu_custom_call.1} parent=71 // pred_check
          %p1554 = pneg %p256
        $region74: #{tpu_custom_call.1} parent=71 // pred_check_branch
          %1556 = sbr.rel (%p1554) target = $region76
        $region75: #{tpu_custom_call.1} parent=71 // pred_region
          %s1557 = sand.u32 %s241, 1
          %s1558 = scalar_lea.sflag [#allocation4], %s1557
          %s1559 = sand.u32 %s241, 1
          %s1560 = smul.addr %s1559, 8
          %s1561 = scalar_lea.vmem [#allocation5], %s1560
          %1562 = dma.done %s1558, 128
        $region76: #{tpu_custom_call.1} parent=71 // pred_fallthru
          _
        // Predicated region
        $region77: #{tpu_custom_call.1} parent=71 // pred_check
          %p1563 = pneg %p282
        $region78: #{tpu_custom_call.1} parent=71 // pred_check_branch
          %1565 = sbr.rel (%p1563) target = $region80
        $region79: #{tpu_custom_call.1} parent=71 // pred_region
          %p1566 = scmp.lt.s32.totalorder %s29, 1
          %s1567 = scalar_select %p1566, %s29, 1
          %s1568 = smul.addr %s1567, 8
          %s1569 = smul.addr %s1568, 8
          %s1570 = scalar_lea.vmem %s10, %s1569
        $region80: #{tpu_custom_call.1} parent=71 // pred_fallthru
          _
      $region72: #{tpu_custom_call.1} parent=5 // pred_fallthru
        _
    $region6: #{tpu_custom_call.1} parent=1 // loop_footer
      %s27 = sadd.s32 1, %s23
    $region7: #{tpu_custom_call.1} parent=1 // loop_footer_branch
      %22 = sbr.rel target = $region3
    $region8: #{tpu_custom_call.1} parent=1 // loop_exit
      _
    %1571 = vsyncpa [#allocation3], 1
    %s1572 = scalar_lea.sflag [#allocation3], 1
    %1573 = vsyncpa %s1572, 1
    %1574 = vsyncpa [#allocation4], 1
    %s1575 = scalar_lea.sflag [#allocation4], 1
    %1576 = vsyncpa %s1575, 1

</llo_original>
